<compile_context>
chip_gen: v5e
topology: v5e:2x2
jax: 0.10.0
libtpu: 0.0.40
codegen_flags: <defaults>
</compile_context>

<pallas_src>
import functools

import numpy as np
import jax
import jax.numpy as jnp
from jax.experimental import pallas as pl
from jax.experimental.pallas import tpu as pltpu

STRIDE = 2
PAD = 1
BN_EPS = 1e-5


def _encoder_fused_kernel(*refs, n_layers, eps):
    """refs = (A0, [S, B, R, Rt, gamma, beta] * n_layers, out).

    A0 / activations: rows = (n, h) -> n*H + h, lanes = (w, c) -> w*C + c.
    """
    a0_ref = refs[0]
    o_ref = refs[1 + 6 * n_layers]

    a = a0_ref[...].astype(jnp.float32)
    idx = 1
    for li in range(n_layers):
        s_ref, b_ref, r_ref, rt_ref, g_ref, bt_ref = refs[idx:idx + 6]
        idx += 6
        n_taps, m_out, _ = s_ref.shape            # (KH, N*Hout, N*Hin)
        l_out = b_ref.shape[2]                    # Wout*Cout
        c_out = r_ref.shape[1]
        w_out = l_out // c_out

        # ---- Conv (bias-free; bias is cancelled by BN) as KH matmul pairs --
        a_bf = a.astype(jnp.bfloat16)
        acc = jnp.zeros((m_out, l_out), jnp.float32)
        for kh in range(n_taps):
            # 0/1 row selection (stride-2 + H-padding folded in) -> exact copy
            sel = jnp.dot(s_ref[kh], a_bf, preferred_element_type=jnp.float32)
            # weight matrix with kw taps, stride-2 and W-padding folded in
            acc = acc + jnp.dot(sel.astype(jnp.bfloat16), b_ref[kh],
                                preferred_element_type=jnp.float32)

        # ---- BatchNorm2d, training-mode batch stats, one pass --------------
        inv_cnt = 1.0 / float(m_out * w_out)      # elements per channel
        r = r_ref[...]                            # (Wout*Cout, Cout) 0/1
        s_ch = jnp.dot(jnp.sum(acc, axis=0, keepdims=True), r,
                       preferred_element_type=jnp.float32)          # (1, Cout)
        ss_ch = jnp.dot(jnp.sum(acc * acc, axis=0, keepdims=True), r,
                        preferred_element_type=jnp.float32)
        mean = s_ch * inv_cnt
        var = jnp.maximum(ss_ch * inv_cnt - mean * mean, 0.0)
        scale = g_ref[...] * jax.lax.rsqrt(var + eps)                # (1, Cout)
        shift = bt_ref[...] - mean * scale
        rt = rt_ref[...]                          # (Cout, Wout*Cout) 0/1
        y = acc * jnp.dot(scale, rt, preferred_element_type=jnp.float32) \
                + jnp.dot(shift, rt, preferred_element_type=jnp.float32)

        # ---- Activation -----------------------------------------------------
        if li == n_layers - 1:
            a = jnp.tanh(y)
        else:
            a = jnp.where(y >= 0.0, y, 0.2 * y)

    o_ref[...] = a.astype(o_ref.dtype)


def _layer_constants(w_hwio, n, h_in, w_in):
    """Fold the 4x4 / stride-2 / pad-1 conv structure into dense matmul operands.

      S[kh] : (N*Hout, N*Hin)       0/1 row selection (drops padded rows)
      B[kh] : (Win*Cin, Wout*Cout)  conv weights with kw taps + W padding folded
      R,Rt  : 0/1 maps between the (ow, co) lane layout and per-channel vectors
    """
    kh_sz, kw_sz, c_in, c_out = w_hwio.shape
    h_out = (h_in + 2 * PAD - kh_sz) // STRIDE + 1
    w_out = (w_in + 2 * PAD - kw_sz) // STRIDE + 1

    s_mat = np.zeros((kh_sz, n * h_out, n * h_in), np.float32)
    for kh in range(kh_sz):
        for nn in range(n):
            for oh in range(h_out):
                h = STRIDE * oh + kh - PAD
                if 0 <= h < h_in:
                    s_mat[kh, nn * h_out + oh, nn * h_in + h] = 1.0

    t_mat = np.zeros((kw_sz, w_in, w_out), np.float32)
    for kw in range(kw_sz):
        for ow in range(w_out):
            wc = STRIDE * ow + kw - PAD
            if 0 <= wc < w_in:
                t_mat[kw, wc, ow] = 1.0

    b_mat = jnp.einsum('xwv,kxio->kwivo', jnp.asarray(t_mat), w_hwio)
    b_mat = b_mat.reshape(kh_sz, w_in * c_in, w_out * c_out)

    r_mat = np.tile(np.eye(c_out, dtype=np.float32), (w_out, 1))

    return (jnp.asarray(s_mat, jnp.bfloat16), b_mat.astype(jnp.bfloat16),
            jnp.asarray(r_mat), jnp.asarray(r_mat.T), h_out, w_out)


def encoder_forward(x_nchw, params):
    """Encoder.forward (encoder_type='cgru'). Input/output are NCHW."""
    n, c_in, h, w = x_nchw.shape
    x = jnp.transpose(x_nchw, (0, 2, 3, 1))              # NCHW -> NHWC (once)
    a0 = x.reshape(n * h, w * c_in)                      # rows=(n,h), lanes=(w,c)

    inputs = [a0]
    hh, ww = h, w
    for (wk, _bias, gamma, beta) in params:              # conv bias dead under BN
        s_mat, b_mat, r_mat, rt_mat, hh, ww = _layer_constants(wk, n, hh, ww)
        c_out = wk.shape[-1]
        inputs += [s_mat, b_mat, r_mat, rt_mat,
                   gamma.reshape(1, c_out), beta.reshape(1, c_out)]
    c_last = params[-1][0].shape[-1]

    vmem = pl.BlockSpec(memory_space=pltpu.MemorySpace.VMEM)
    # NOTE: at this size (total working set < 1 MiB) a single un-gridded launch
    # on one TensorCore is optimal.  When batch/time is scaled up, add a grid
    # over the row (N*T*H) axis marked "parallel" (megacore, v7x 64 MiB VMEM
    # tiles) and switch BN to a two-phase cross-tile sum/sumsq reduction.
    out2d = pl.pallas_call(
        functools.partial(_encoder_fused_kernel,
                          n_layers=len(params), eps=BN_EPS),
        out_shape=jax.ShapeDtypeStruct((n * hh, ww * c_last), jnp.float32),
        in_specs=[vmem] * len(inputs),
        out_specs=vmem,
    )(*inputs)

    out = out2d.reshape(n, hh, ww, c_last)               # NHWC
    return jnp.transpose(out, (0, 3, 1, 2))              # -> NCHW


def make_encoder_params(in_ch, encoder_out_dims, key):
    """Deterministic synthetic parameters for the 'cgru' encoder."""
    chans = [in_ch, 16, 32, 64, encoder_out_dims]
    params = []
    for li in range(4):
        cin, cout = chans[li], chans[li + 1]
        key, kw, kb = jax.random.split(key, 3)
        fan_in = cin * 4 * 4
        scale = 1.0 / jnp.sqrt(jnp.float32(fan_in))
        w = jax.random.normal(kw, (4, 4, cin, cout), jnp.float32) * scale
        b = jax.random.normal(kb, (cout,), jnp.float32) * scale   # dead under BN
        gamma = jnp.ones((cout,), jnp.float32)
        beta = jnp.zeros((cout,), jnp.float32)
        params.append((w, b, gamma, beta))
    return params


def encoder_reference(x_nchw, params, eps=BN_EPS):
    """Pure-JAX reference with the same bf16-input / f32-accum conv rounding."""
    x = jnp.transpose(x_nchw, (0, 2, 3, 1)).astype(jnp.float32)
    n_layers = len(params)
    for li, (w, b, gamma, beta) in enumerate(params):
        xb = x.astype(jnp.bfloat16).astype(jnp.float32)
        wb = w.astype(jnp.bfloat16).astype(jnp.float32)
        y = jax.lax.conv_general_dilated(
            xb, wb, window_strides=(STRIDE, STRIDE),
            padding=[(PAD, PAD), (PAD, PAD)],
            dimension_numbers=('NHWC', 'HWIO', 'NHWC'),
            precision=jax.lax.Precision.HIGHEST)
        y = y + b                                        # cancelled by BN mean
        mean = jnp.mean(y, axis=(0, 1, 2), keepdims=True)
        var = jnp.mean((y - mean) ** 2, axis=(0, 1, 2), keepdims=True)
        y = gamma * (y - mean) * jax.lax.rsqrt(var + eps) + beta
        x = jnp.tanh(y) if li == n_layers - 1 else jnp.where(y >= 0, y, 0.2 * y)
    return jnp.transpose(x, (0, 3, 1, 2))


if __name__ == "__main__":
    key = jax.random.PRNGKey(0)
    k_x, k_p = jax.random.split(key)

    N, in_ch, H, W = 2, 4, 16, 16          # resize=16 input for 'cgru'
    encoder_out_dims = 32

    x = jax.random.normal(k_x, (N, in_ch, H, W), jnp.float32)
    params = make_encoder_params(in_ch, encoder_out_dims, k_p)

    out = jax.block_until_ready(jax.jit(encoder_forward)(x, params))
    assert out.shape == (N, encoder_out_dims, 1, 1), out.shape
    assert bool(jnp.all(jnp.isfinite(out)))

    ref = jax.block_until_ready(encoder_reference(x, params))
    max_err = float(jnp.max(jnp.abs(out - ref)))
    assert max_err < 5e-2, f"max |kernel - reference| = {max_err}"

    print("KERNEL_OK")
</pallas_src>

<mosaic_0001>
module attributes {stable_mosaic.version = 11 : i64} {
  func.func @_encoder_fused_kernel(%arg0: memref<32x64xf32, #tpu.memory_space<vmem>>, %arg1: memref<4x16x32xbf16, #tpu.memory_space<vmem>>, %arg2: memref<4x64x128xbf16, #tpu.memory_space<vmem>>, %arg3: memref<128x16xf32, #tpu.memory_space<vmem>>, %arg4: memref<16x128xf32, #tpu.memory_space<vmem>>, %arg5: memref<1x16xf32, #tpu.memory_space<vmem>>, %arg6: memref<1x16xf32, #tpu.memory_space<vmem>>, %arg7: memref<4x8x16xbf16, #tpu.memory_space<vmem>>, %arg8: memref<4x128x128xbf16, #tpu.memory_space<vmem>>, %arg9: memref<128x32xf32, #tpu.memory_space<vmem>>, %arg10: memref<32x128xf32, #tpu.memory_space<vmem>>, %arg11: memref<1x32xf32, #tpu.memory_space<vmem>>, %arg12: memref<1x32xf32, #tpu.memory_space<vmem>>, %arg13: memref<4x4x8xbf16, #tpu.memory_space<vmem>>, %arg14: memref<4x128x128xbf16, #tpu.memory_space<vmem>>, %arg15: memref<128x64xf32, #tpu.memory_space<vmem>>, %arg16: memref<64x128xf32, #tpu.memory_space<vmem>>, %arg17: memref<1x64xf32, #tpu.memory_space<vmem>>, %arg18: memref<1x64xf32, #tpu.memory_space<vmem>>, %arg19: memref<4x2x4xbf16, #tpu.memory_space<vmem>>, %arg20: memref<4x128x32xbf16, #tpu.memory_space<vmem>>, %arg21: memref<32x32xf32, #tpu.memory_space<vmem>>, %arg22: memref<32x32xf32, #tpu.memory_space<vmem>>, %arg23: memref<1x32xf32, #tpu.memory_space<vmem>>, %arg24: memref<1x32xf32, #tpu.memory_space<vmem>>, %arg25: memref<2x32xf32, #tpu.memory_space<vmem>>) attributes {dimension_semantics = [], scalar_prefetch = 0 : i64, scratch_operands = 0 : i64, tpu.core_type = #tpu.core_type<tc>} {
    %c0 = arith.constant 0 : index
    %c0_0 = arith.constant 0 : index
    %0 = vector.load %arg0[%c0, %c0_0] : memref<32x64xf32, #tpu.memory_space<vmem>>, vector<32x64xf32>
    %1 = arith.truncf %0 : vector<32x64xf32> to vector<32x64xbf16>
    %cst = arith.constant 0.000000e+00 : f32
    %2 = vector.broadcast %cst : f32 to vector<16x128xf32>
    %c0_1 = arith.constant 0 : index
    %c0_2 = arith.constant 0 : index
    %c0_3 = arith.constant 0 : index
    %3 = vector.load %arg1[%c0_1, %c0_2, %c0_3] : memref<4x16x32xbf16, #tpu.memory_space<vmem>>, vector<1x16x32xbf16>
    %4 = vector.shape_cast %3 : vector<1x16x32xbf16> to vector<16x32xbf16>
    %cst_4 = arith.constant dense<0.000000e+00> : vector<16x64xf32>
    %5 = tpu.matmul %4, %1, %cst_4 {dimension_numbers = #tpu.dot_dimension_numbers<[1], [0], [0], [1], [0, 0, 1, 1], [], []>} : vector<16x32xbf16>, vector<32x64xbf16>, vector<16x64xf32> -> vector<16x64xf32>
    %6 = arith.truncf %5 : vector<16x64xf32> to vector<16x64xbf16>
    %c0_5 = arith.constant 0 : index
    %c0_6 = arith.constant 0 : index
    %c0_7 = arith.constant 0 : index
    %7 = vector.load %arg2[%c0_5, %c0_6, %c0_7] : memref<4x64x128xbf16, #tpu.memory_space<vmem>>, vector<1x64x128xbf16>
    %8 = vector.shape_cast %7 : vector<1x64x128xbf16> to vector<64x128xbf16>
    %cst_8 = arith.constant dense<0.000000e+00> : vector<16x128xf32>
    %9 = tpu.matmul %6, %8, %cst_8 {dimension_numbers = #tpu.dot_dimension_numbers<[1], [0], [0], [1], [0, 0, 1, 1], [], []>} : vector<16x64xbf16>, vector<64x128xbf16>, vector<16x128xf32> -> vector<16x128xf32>
    %10 = arith.addf %2, %9 : vector<16x128xf32>
    %c1 = arith.constant 1 : index
    %c0_9 = arith.constant 0 : index
    %c0_10 = arith.constant 0 : index
    %11 = vector.load %arg1[%c1, %c0_9, %c0_10] : memref<4x16x32xbf16, #tpu.memory_space<vmem>>, vector<1x16x32xbf16>
    %12 = vector.shape_cast %11 : vector<1x16x32xbf16> to vector<16x32xbf16>
    %cst_11 = arith.constant dense<0.000000e+00> : vector<16x64xf32>
    %13 = tpu.matmul %12, %1, %cst_11 {dimension_numbers = #tpu.dot_dimension_numbers<[1], [0], [0], [1], [0, 0, 1, 1], [], []>} : vector<16x32xbf16>, vector<32x64xbf16>, vector<16x64xf32> -> vector<16x64xf32>
    %14 = arith.truncf %13 : vector<16x64xf32> to vector<16x64xbf16>
    %c1_12 = arith.constant 1 : index
    %c0_13 = arith.constant 0 : index
    %c0_14 = arith.constant 0 : index
    %15 = vector.load %arg2[%c1_12, %c0_13, %c0_14] : memref<4x64x128xbf16, #tpu.memory_space<vmem>>, vector<1x64x128xbf16>
    %16 = vector.shape_cast %15 : vector<1x64x128xbf16> to vector<64x128xbf16>
    %cst_15 = arith.constant dense<0.000000e+00> : vector<16x128xf32>
    %17 = tpu.matmul %14, %16, %cst_15 {dimension_numbers = #tpu.dot_dimension_numbers<[1], [0], [0], [1], [0, 0, 1, 1], [], []>} : vector<16x64xbf16>, vector<64x128xbf16>, vector<16x128xf32> -> vector<16x128xf32>
    %18 = arith.addf %10, %17 : vector<16x128xf32>
    %c2 = arith.constant 2 : index
    %c0_16 = arith.constant 0 : index
    %c0_17 = arith.constant 0 : index
    %19 = vector.load %arg1[%c2, %c0_16, %c0_17] : memref<4x16x32xbf16, #tpu.memory_space<vmem>>, vector<1x16x32xbf16>
    %20 = vector.shape_cast %19 : vector<1x16x32xbf16> to vector<16x32xbf16>
    %cst_18 = arith.constant dense<0.000000e+00> : vector<16x64xf32>
    %21 = tpu.matmul %20, %1, %cst_18 {dimension_numbers = #tpu.dot_dimension_numbers<[1], [0], [0], [1], [0, 0, 1, 1], [], []>} : vector<16x32xbf16>, vector<32x64xbf16>, vector<16x64xf32> -> vector<16x64xf32>
    %22 = arith.truncf %21 : vector<16x64xf32> to vector<16x64xbf16>
    %c2_19 = arith.constant 2 : index
    %c0_20 = arith.constant 0 : index
    %c0_21 = arith.constant 0 : index
    %23 = vector.load %arg2[%c2_19, %c0_20, %c0_21] : memref<4x64x128xbf16, #tpu.memory_space<vmem>>, vector<1x64x128xbf16>
    %24 = vector.shape_cast %23 : vector<1x64x128xbf16> to vector<64x128xbf16>
    %cst_22 = arith.constant dense<0.000000e+00> : vector<16x128xf32>
    %25 = tpu.matmul %22, %24, %cst_22 {dimension_numbers = #tpu.dot_dimension_numbers<[1], [0], [0], [1], [0, 0, 1, 1], [], []>} : vector<16x64xbf16>, vector<64x128xbf16>, vector<16x128xf32> -> vector<16x128xf32>
    %26 = arith.addf %18, %25 : vector<16x128xf32>
    %c3 = arith.constant 3 : index
    %c0_23 = arith.constant 0 : index
    %c0_24 = arith.constant 0 : index
    %27 = vector.load %arg1[%c3, %c0_23, %c0_24] : memref<4x16x32xbf16, #tpu.memory_space<vmem>>, vector<1x16x32xbf16>
    %28 = vector.shape_cast %27 : vector<1x16x32xbf16> to vector<16x32xbf16>
    %cst_25 = arith.constant dense<0.000000e+00> : vector<16x64xf32>
    %29 = tpu.matmul %28, %1, %cst_25 {dimension_numbers = #tpu.dot_dimension_numbers<[1], [0], [0], [1], [0, 0, 1, 1], [], []>} : vector<16x32xbf16>, vector<32x64xbf16>, vector<16x64xf32> -> vector<16x64xf32>
    %30 = arith.truncf %29 : vector<16x64xf32> to vector<16x64xbf16>
    %c3_26 = arith.constant 3 : index
    %c0_27 = arith.constant 0 : index
    %c0_28 = arith.constant 0 : index
    %31 = vector.load %arg2[%c3_26, %c0_27, %c0_28] : memref<4x64x128xbf16, #tpu.memory_space<vmem>>, vector<1x64x128xbf16>
    %32 = vector.shape_cast %31 : vector<1x64x128xbf16> to vector<64x128xbf16>
    %cst_29 = arith.constant dense<0.000000e+00> : vector<16x128xf32>
    %33 = tpu.matmul %30, %32, %cst_29 {dimension_numbers = #tpu.dot_dimension_numbers<[1], [0], [0], [1], [0, 0, 1, 1], [], []>} : vector<16x64xbf16>, vector<64x128xbf16>, vector<16x128xf32> -> vector<16x128xf32>
    %34 = arith.addf %26, %33 : vector<16x128xf32>
    %c0_30 = arith.constant 0 : index
    %c0_31 = arith.constant 0 : index
    %35 = vector.load %arg3[%c0_30, %c0_31] : memref<128x16xf32, #tpu.memory_space<vmem>>, vector<128x16xf32>
    %cst_32 = arith.constant dense<0.000000e+00> : vector<128xf32>
    %36 = vector.multi_reduction <add>, %34, %cst_32 [0] : vector<16x128xf32> to vector<128xf32>
    %37 = vector.shape_cast %36 : vector<128xf32> to vector<1x128xf32>
    %cst_33 = arith.constant dense<0.000000e+00> : vector<1x16xf32>
    %38 = tpu.matmul %37, %35, %cst_33 {dimension_numbers = #tpu.dot_dimension_numbers<[1], [0], [0], [1], [0, 0, 1, 1], [], []>} : vector<1x128xf32>, vector<128x16xf32>, vector<1x16xf32> -> vector<1x16xf32>
    %39 = arith.mulf %34, %34 : vector<16x128xf32>
    %cst_34 = arith.constant dense<0.000000e+00> : vector<128xf32>
    %40 = vector.multi_reduction <add>, %39, %cst_34 [0] : vector<16x128xf32> to vector<128xf32>
    %41 = vector.shape_cast %40 : vector<128xf32> to vector<1x128xf32>
    %cst_35 = arith.constant dense<0.000000e+00> : vector<1x16xf32>
    %42 = tpu.matmul %41, %35, %cst_35 {dimension_numbers = #tpu.dot_dimension_numbers<[1], [0], [0], [1], [0, 0, 1, 1], [], []>} : vector<1x128xf32>, vector<128x16xf32>, vector<1x16xf32> -> vector<1x16xf32>
    %cst_36 = arith.constant 7.812500e-03 : f32
    %43 = vector.broadcast %cst_36 : f32 to vector<1x16xf32>
    %44 = arith.mulf %38, %43 : vector<1x16xf32>
    %cst_37 = arith.constant 7.812500e-03 : f32
    %45 = vector.broadcast %cst_37 : f32 to vector<1x16xf32>
    %46 = arith.mulf %42, %45 : vector<1x16xf32>
    %47 = arith.mulf %44, %44 : vector<1x16xf32>
    %48 = arith.subf %46, %47 : vector<1x16xf32>
    %cst_38 = arith.constant 0.000000e+00 : f32
    %49 = vector.broadcast %cst_38 : f32 to vector<1x16xf32>
    %50 = arith.maximumf %48, %49 : vector<1x16xf32>
    %c0_39 = arith.constant 0 : index
    %c0_40 = arith.constant 0 : index
    %51 = vector.load %arg5[%c0_39, %c0_40] : memref<1x16xf32, #tpu.memory_space<vmem>>, vector<1x16xf32>
    %cst_41 = arith.constant 9.99999974E-6 : f32
    %52 = vector.broadcast %cst_41 : f32 to vector<1x16xf32>
    %53 = arith.addf %50, %52 : vector<1x16xf32>
    %54 = math.rsqrt %53 : vector<1x16xf32>
    %55 = arith.mulf %51, %54 : vector<1x16xf32>
    %c0_42 = arith.constant 0 : index
    %c0_43 = arith.constant 0 : index
    %56 = vector.load %arg6[%c0_42, %c0_43] : memref<1x16xf32, #tpu.memory_space<vmem>>, vector<1x16xf32>
    %57 = arith.mulf %44, %55 : vector<1x16xf32>
    %58 = arith.subf %56, %57 : vector<1x16xf32>
    %c0_44 = arith.constant 0 : index
    %c0_45 = arith.constant 0 : index
    %59 = vector.load %arg4[%c0_44, %c0_45] : memref<16x128xf32, #tpu.memory_space<vmem>>, vector<16x128xf32>
    %cst_46 = arith.constant dense<0.000000e+00> : vector<1x128xf32>
    %60 = tpu.matmul %55, %59, %cst_46 {dimension_numbers = #tpu.dot_dimension_numbers<[1], [0], [0], [1], [0, 0, 1, 1], [], []>} : vector<1x16xf32>, vector<16x128xf32>, vector<1x128xf32> -> vector<1x128xf32>
    %61 = vector.broadcast %60 : vector<1x128xf32> to vector<16x128xf32>
    %62 = arith.mulf %34, %61 : vector<16x128xf32>
    %cst_47 = arith.constant dense<0.000000e+00> : vector<1x128xf32>
    %63 = tpu.matmul %58, %59, %cst_47 {dimension_numbers = #tpu.dot_dimension_numbers<[1], [0], [0], [1], [0, 0, 1, 1], [], []>} : vector<1x16xf32>, vector<16x128xf32>, vector<1x128xf32> -> vector<1x128xf32>
    %64 = vector.broadcast %63 : vector<1x128xf32> to vector<16x128xf32>
    %65 = arith.addf %62, %64 : vector<16x128xf32>
    %cst_48 = arith.constant 0.000000e+00 : f32
    %66 = vector.broadcast %cst_48 : f32 to vector<16x128xf32>
    %67 = arith.cmpf oge, %65, %66 : vector<16x128xf32>
    %cst_49 = arith.constant 2.000000e-01 : f32
    %68 = vector.broadcast %cst_49 : f32 to vector<16x128xf32>
    %69 = arith.mulf %68, %65 : vector<16x128xf32>
    %70 = arith.select %67, %65, %69 : vector<16x128xi1>, vector<16x128xf32>
    %71 = arith.truncf %70 : vector<16x128xf32> to vector<16x128xbf16>
    %cst_50 = arith.constant 0.000000e+00 : f32
    %72 = vector.broadcast %cst_50 : f32 to vector<8x128xf32>
    %c0_51 = arith.constant 0 : index
    %c0_52 = arith.constant 0 : index
    %c0_53 = arith.constant 0 : index
    %73 = vector.load %arg7[%c0_51, %c0_52, %c0_53] : memref<4x8x16xbf16, #tpu.memory_space<vmem>>, vector<1x8x16xbf16>
    %74 = vector.shape_cast %73 : vector<1x8x16xbf16> to vector<8x16xbf16>
    %cst_54 = arith.constant dense<0.000000e+00> : vector<8x128xf32>
    %75 = tpu.matmul %74, %71, %cst_54 {dimension_numbers = #tpu.dot_dimension_numbers<[1], [0], [0], [1], [0, 0, 1, 1], [], []>} : vector<8x16xbf16>, vector<16x128xbf16>, vector<8x128xf32> -> vector<8x128xf32>
    %76 = arith.truncf %75 : vector<8x128xf32> to vector<8x128xbf16>
    %c0_55 = arith.constant 0 : index
    %c0_56 = arith.constant 0 : index
    %c0_57 = arith.constant 0 : index
    %77 = vector.load %arg8[%c0_55, %c0_56, %c0_57] : memref<4x128x128xbf16, #tpu.memory_space<vmem>>, vector<1x128x128xbf16>
    %78 = vector.shape_cast %77 : vector<1x128x128xbf16> to vector<128x128xbf16>
    %cst_58 = arith.constant dense<0.000000e+00> : vector<8x128xf32>
    %79 = tpu.matmul %76, %78, %cst_58 {dimension_numbers = #tpu.dot_dimension_numbers<[1], [0], [0], [1], [0, 0, 1, 1], [], []>} : vector<8x128xbf16>, vector<128x128xbf16>, vector<8x128xf32> -> vector<8x128xf32>
    %80 = arith.addf %72, %79 : vector<8x128xf32>
    %c1_59 = arith.constant 1 : index
    %c0_60 = arith.constant 0 : index
    %c0_61 = arith.constant 0 : index
    %81 = vector.load %arg7[%c1_59, %c0_60, %c0_61] : memref<4x8x16xbf16, #tpu.memory_space<vmem>>, vector<1x8x16xbf16>
    %82 = vector.shape_cast %81 : vector<1x8x16xbf16> to vector<8x16xbf16>
    %cst_62 = arith.constant dense<0.000000e+00> : vector<8x128xf32>
    %83 = tpu.matmul %82, %71, %cst_62 {dimension_numbers = #tpu.dot_dimension_numbers<[1], [0], [0], [1], [0, 0, 1, 1], [], []>} : vector<8x16xbf16>, vector<16x128xbf16>, vector<8x128xf32> -> vector<8x128xf32>
    %84 = arith.truncf %83 : vector<8x128xf32> to vector<8x128xbf16>
    %c1_63 = arith.constant 1 : index
    %c0_64 = arith.constant 0 : index
    %c0_65 = arith.constant 0 : index
    %85 = vector.load %arg8[%c1_63, %c0_64, %c0_65] : memref<4x128x128xbf16, #tpu.memory_space<vmem>>, vector<1x128x128xbf16>
    %86 = vector.shape_cast %85 : vector<1x128x128xbf16> to vector<128x128xbf16>
    %cst_66 = arith.constant dense<0.000000e+00> : vector<8x128xf32>
    %87 = tpu.matmul %84, %86, %cst_66 {dimension_numbers = #tpu.dot_dimension_numbers<[1], [0], [0], [1], [0, 0, 1, 1], [], []>} : vector<8x128xbf16>, vector<128x128xbf16>, vector<8x128xf32> -> vector<8x128xf32>
    %88 = arith.addf %80, %87 : vector<8x128xf32>
    %c2_67 = arith.constant 2 : index
    %c0_68 = arith.constant 0 : index
    %c0_69 = arith.constant 0 : index
    %89 = vector.load %arg7[%c2_67, %c0_68, %c0_69] : memref<4x8x16xbf16, #tpu.memory_space<vmem>>, vector<1x8x16xbf16>
    %90 = vector.shape_cast %89 : vector<1x8x16xbf16> to vector<8x16xbf16>
    %cst_70 = arith.constant dense<0.000000e+00> : vector<8x128xf32>
    %91 = tpu.matmul %90, %71, %cst_70 {dimension_numbers = #tpu.dot_dimension_numbers<[1], [0], [0], [1], [0, 0, 1, 1], [], []>} : vector<8x16xbf16>, vector<16x128xbf16>, vector<8x128xf32> -> vector<8x128xf32>
    %92 = arith.truncf %91 : vector<8x128xf32> to vector<8x128xbf16>
    %c2_71 = arith.constant 2 : index
    %c0_72 = arith.constant 0 : index
    %c0_73 = arith.constant 0 : index
    %93 = vector.load %arg8[%c2_71, %c0_72, %c0_73] : memref<4x128x128xbf16, #tpu.memory_space<vmem>>, vector<1x128x128xbf16>
    %94 = vector.shape_cast %93 : vector<1x128x128xbf16> to vector<128x128xbf16>
    %cst_74 = arith.constant dense<0.000000e+00> : vector<8x128xf32>
    %95 = tpu.matmul %92, %94, %cst_74 {dimension_numbers = #tpu.dot_dimension_numbers<[1], [0], [0], [1], [0, 0, 1, 1], [], []>} : vector<8x128xbf16>, vector<128x128xbf16>, vector<8x128xf32> -> vector<8x128xf32>
    %96 = arith.addf %88, %95 : vector<8x128xf32>
    %c3_75 = arith.constant 3 : index
    %c0_76 = arith.constant 0 : index
    %c0_77 = arith.constant 0 : index
    %97 = vector.load %arg7[%c3_75, %c0_76, %c0_77] : memref<4x8x16xbf16, #tpu.memory_space<vmem>>, vector<1x8x16xbf16>
    %98 = vector.shape_cast %97 : vector<1x8x16xbf16> to vector<8x16xbf16>
    %cst_78 = arith.constant dense<0.000000e+00> : vector<8x128xf32>
    %99 = tpu.matmul %98, %71, %cst_78 {dimension_numbers = #tpu.dot_dimension_numbers<[1], [0], [0], [1], [0, 0, 1, 1], [], []>} : vector<8x16xbf16>, vector<16x128xbf16>, vector<8x128xf32> -> vector<8x128xf32>
    %100 = arith.truncf %99 : vector<8x128xf32> to vector<8x128xbf16>
    %c3_79 = arith.constant 3 : index
    %c0_80 = arith.constant 0 : index
    %c0_81 = arith.constant 0 : index
    %101 = vector.load %arg8[%c3_79, %c0_80, %c0_81] : memref<4x128x128xbf16, #tpu.memory_space<vmem>>, vector<1x128x128xbf16>
    %102 = vector.shape_cast %101 : vector<1x128x128xbf16> to vector<128x128xbf16>
    %cst_82 = arith.constant dense<0.000000e+00> : vector<8x128xf32>
    %103 = tpu.matmul %100, %102, %cst_82 {dimension_numbers = #tpu.dot_dimension_numbers<[1], [0], [0], [1], [0, 0, 1, 1], [], []>} : vector<8x128xbf16>, vector<128x128xbf16>, vector<8x128xf32> -> vector<8x128xf32>
    %104 = arith.addf %96, %103 : vector<8x128xf32>
    %c0_83 = arith.constant 0 : index
    %c0_84 = arith.constant 0 : index
    %105 = vector.load %arg9[%c0_83, %c0_84] : memref<128x32xf32, #tpu.memory_space<vmem>>, vector<128x32xf32>
    %cst_85 = arith.constant dense<0.000000e+00> : vector<128xf32>
    %106 = vector.multi_reduction <add>, %104, %cst_85 [0] : vector<8x128xf32> to vector<128xf32>
    %107 = vector.shape_cast %106 : vector<128xf32> to vector<1x128xf32>
    %cst_86 = arith.constant dense<0.000000e+00> : vector<1x32xf32>
    %108 = tpu.matmul %107, %105, %cst_86 {dimension_numbers = #tpu.dot_dimension_numbers<[1], [0], [0], [1], [0, 0, 1, 1], [], []>} : vector<1x128xf32>, vector<128x32xf32>, vector<1x32xf32> -> vector<1x32xf32>
    %109 = arith.mulf %104, %104 : vector<8x128xf32>
    %cst_87 = arith.constant dense<0.000000e+00> : vector<128xf32>
    %110 = vector.multi_reduction <add>, %109, %cst_87 [0] : vector<8x128xf32> to vector<128xf32>
    %111 = vector.shape_cast %110 : vector<128xf32> to vector<1x128xf32>
    %cst_88 = arith.constant dense<0.000000e+00> : vector<1x32xf32>
    %112 = tpu.matmul %111, %105, %cst_88 {dimension_numbers = #tpu.dot_dimension_numbers<[1], [0], [0], [1], [0, 0, 1, 1], [], []>} : vector<1x128xf32>, vector<128x32xf32>, vector<1x32xf32> -> vector<1x32xf32>
    %cst_89 = arith.constant 3.125000e-02 : f32
    %113 = vector.broadcast %cst_89 : f32 to vector<1x32xf32>
    %114 = arith.mulf %108, %113 : vector<1x32xf32>
    %cst_90 = arith.constant 3.125000e-02 : f32
    %115 = vector.broadcast %cst_90 : f32 to vector<1x32xf32>
    %116 = arith.mulf %112, %115 : vector<1x32xf32>
    %117 = arith.mulf %114, %114 : vector<1x32xf32>
    %118 = arith.subf %116, %117 : vector<1x32xf32>
    %cst_91 = arith.constant 0.000000e+00 : f32
    %119 = vector.broadcast %cst_91 : f32 to vector<1x32xf32>
    %120 = arith.maximumf %118, %119 : vector<1x32xf32>
    %c0_92 = arith.constant 0 : index
    %c0_93 = arith.constant 0 : index
    %121 = vector.load %arg11[%c0_92, %c0_93] : memref<1x32xf32, #tpu.memory_space<vmem>>, vector<1x32xf32>
    %cst_94 = arith.constant 9.99999974E-6 : f32
    %122 = vector.broadcast %cst_94 : f32 to vector<1x32xf32>
    %123 = arith.addf %120, %122 : vector<1x32xf32>
    %124 = math.rsqrt %123 : vector<1x32xf32>
    %125 = arith.mulf %121, %124 : vector<1x32xf32>
    %c0_95 = arith.constant 0 : index
    %c0_96 = arith.constant 0 : index
    %126 = vector.load %arg12[%c0_95, %c0_96] : memref<1x32xf32, #tpu.memory_space<vmem>>, vector<1x32xf32>
    %127 = arith.mulf %114, %125 : vector<1x32xf32>
    %128 = arith.subf %126, %127 : vector<1x32xf32>
    %c0_97 = arith.constant 0 : index
    %c0_98 = arith.constant 0 : index
    %129 = vector.load %arg10[%c0_97, %c0_98] : memref<32x128xf32, #tpu.memory_space<vmem>>, vector<32x128xf32>
    %cst_99 = arith.constant dense<0.000000e+00> : vector<1x128xf32>
    %130 = tpu.matmul %125, %129, %cst_99 {dimension_numbers = #tpu.dot_dimension_numbers<[1], [0], [0], [1], [0, 0, 1, 1], [], []>} : vector<1x32xf32>, vector<32x128xf32>, vector<1x128xf32> -> vector<1x128xf32>
    %131 = vector.broadcast %130 : vector<1x128xf32> to vector<8x128xf32>
    %132 = arith.mulf %104, %131 : vector<8x128xf32>
    %cst_100 = arith.constant dense<0.000000e+00> : vector<1x128xf32>
    %133 = tpu.matmul %128, %129, %cst_100 {dimension_numbers = #tpu.dot_dimension_numbers<[1], [0], [0], [1], [0, 0, 1, 1], [], []>} : vector<1x32xf32>, vector<32x128xf32>, vector<1x128xf32> -> vector<1x128xf32>
    %134 = vector.broadcast %133 : vector<1x128xf32> to vector<8x128xf32>
    %135 = arith.addf %132, %134 : vector<8x128xf32>
    %cst_101 = arith.constant 0.000000e+00 : f32
    %136 = vector.broadcast %cst_101 : f32 to vector<8x128xf32>
    %137 = arith.cmpf oge, %135, %136 : vector<8x128xf32>
    %cst_102 = arith.constant 2.000000e-01 : f32
    %138 = vector.broadcast %cst_102 : f32 to vector<8x128xf32>
    %139 = arith.mulf %138, %135 : vector<8x128xf32>
    %140 = arith.select %137, %135, %139 : vector<8x128xi1>, vector<8x128xf32>
    %141 = arith.truncf %140 : vector<8x128xf32> to vector<8x128xbf16>
    %cst_103 = arith.constant 0.000000e+00 : f32
    %142 = vector.broadcast %cst_103 : f32 to vector<4x128xf32>
    %c0_104 = arith.constant 0 : index
    %c0_105 = arith.constant 0 : index
    %c0_106 = arith.constant 0 : index
    %143 = vector.load %arg13[%c0_104, %c0_105, %c0_106] : memref<4x4x8xbf16, #tpu.memory_space<vmem>>, vector<1x4x8xbf16>
    %144 = vector.shape_cast %143 : vector<1x4x8xbf16> to vector<4x8xbf16>
    %cst_107 = arith.constant dense<0.000000e+00> : vector<4x128xf32>
    %145 = tpu.matmul %144, %141, %cst_107 {dimension_numbers = #tpu.dot_dimension_numbers<[1], [0], [0], [1], [0, 0, 1, 1], [], []>} : vector<4x8xbf16>, vector<8x128xbf16>, vector<4x128xf32> -> vector<4x128xf32>
    %146 = arith.truncf %145 : vector<4x128xf32> to vector<4x128xbf16>
    %c0_108 = arith.constant 0 : index
    %c0_109 = arith.constant 0 : index
    %c0_110 = arith.constant 0 : index
    %147 = vector.load %arg14[%c0_108, %c0_109, %c0_110] : memref<4x128x128xbf16, #tpu.memory_space<vmem>>, vector<1x128x128xbf16>
    %148 = vector.shape_cast %147 : vector<1x128x128xbf16> to vector<128x128xbf16>
    %cst_111 = arith.constant dense<0.000000e+00> : vector<4x128xf32>
    %149 = tpu.matmul %146, %148, %cst_111 {dimension_numbers = #tpu.dot_dimension_numbers<[1], [0], [0], [1], [0, 0, 1, 1], [], []>} : vector<4x128xbf16>, vector<128x128xbf16>, vector<4x128xf32> -> vector<4x128xf32>
    %150 = arith.addf %142, %149 : vector<4x128xf32>
    %c1_112 = arith.constant 1 : index
    %c0_113 = arith.constant 0 : index
    %c0_114 = arith.constant 0 : index
    %151 = vector.load %arg13[%c1_112, %c0_113, %c0_114] : memref<4x4x8xbf16, #tpu.memory_space<vmem>>, vector<1x4x8xbf16>
    %152 = vector.shape_cast %151 : vector<1x4x8xbf16> to vector<4x8xbf16>
    %cst_115 = arith.constant dense<0.000000e+00> : vector<4x128xf32>
    %153 = tpu.matmul %152, %141, %cst_115 {dimension_numbers = #tpu.dot_dimension_numbers<[1], [0], [0], [1], [0, 0, 1, 1], [], []>} : vector<4x8xbf16>, vector<8x128xbf16>, vector<4x128xf32> -> vector<4x128xf32>
    %154 = arith.truncf %153 : vector<4x128xf32> to vector<4x128xbf16>
    %c1_116 = arith.constant 1 : index
    %c0_117 = arith.constant 0 : index
    %c0_118 = arith.constant 0 : index
    %155 = vector.load %arg14[%c1_116, %c0_117, %c0_118] : memref<4x128x128xbf16, #tpu.memory_space<vmem>>, vector<1x128x128xbf16>
    %156 = vector.shape_cast %155 : vector<1x128x128xbf16> to vector<128x128xbf16>
    %cst_119 = arith.constant dense<0.000000e+00> : vector<4x128xf32>
    %157 = tpu.matmul %154, %156, %cst_119 {dimension_numbers = #tpu.dot_dimension_numbers<[1], [0], [0], [1], [0, 0, 1, 1], [], []>} : vector<4x128xbf16>, vector<128x128xbf16>, vector<4x128xf32> -> vector<4x128xf32>
    %158 = arith.addf %150, %157 : vector<4x128xf32>
    %c2_120 = arith.constant 2 : index
    %c0_121 = arith.constant 0 : index
    %c0_122 = arith.constant 0 : index
    %159 = vector.load %arg13[%c2_120, %c0_121, %c0_122] : memref<4x4x8xbf16, #tpu.memory_space<vmem>>, vector<1x4x8xbf16>
    %160 = vector.shape_cast %159 : vector<1x4x8xbf16> to vector<4x8xbf16>
    %cst_123 = arith.constant dense<0.000000e+00> : vector<4x128xf32>
    %161 = tpu.matmul %160, %141, %cst_123 {dimension_numbers = #tpu.dot_dimension_numbers<[1], [0], [0], [1], [0, 0, 1, 1], [], []>} : vector<4x8xbf16>, vector<8x128xbf16>, vector<4x128xf32> -> vector<4x128xf32>
    %162 = arith.truncf %161 : vector<4x128xf32> to vector<4x128xbf16>
    %c2_124 = arith.constant 2 : index
    %c0_125 = arith.constant 0 : index
    %c0_126 = arith.constant 0 : index
    %163 = vector.load %arg14[%c2_124, %c0_125, %c0_126] : memref<4x128x128xbf16, #tpu.memory_space<vmem>>, vector<1x128x128xbf16>
    %164 = vector.shape_cast %163 : vector<1x128x128xbf16> to vector<128x128xbf16>
    %cst_127 = arith.constant dense<0.000000e+00> : vector<4x128xf32>
    %165 = tpu.matmul %162, %164, %cst_127 {dimension_numbers = #tpu.dot_dimension_numbers<[1], [0], [0], [1], [0, 0, 1, 1], [], []>} : vector<4x128xbf16>, vector<128x128xbf16>, vector<4x128xf32> -> vector<4x128xf32>
    %166 = arith.addf %158, %165 : vector<4x128xf32>
    %c3_128 = arith.constant 3 : index
    %c0_129 = arith.constant 0 : index
    %c0_130 = arith.constant 0 : index
    %167 = vector.load %arg13[%c3_128, %c0_129, %c0_130] : memref<4x4x8xbf16, #tpu.memory_space<vmem>>, vector<1x4x8xbf16>
    %168 = vector.shape_cast %167 : vector<1x4x8xbf16> to vector<4x8xbf16>
    %cst_131 = arith.constant dense<0.000000e+00> : vector<4x128xf32>
    %169 = tpu.matmul %168, %141, %cst_131 {dimension_numbers = #tpu.dot_dimension_numbers<[1], [0], [0], [1], [0, 0, 1, 1], [], []>} : vector<4x8xbf16>, vector<8x128xbf16>, vector<4x128xf32> -> vector<4x128xf32>
    %170 = arith.truncf %169 : vector<4x128xf32> to vector<4x128xbf16>
    %c3_132 = arith.constant 3 : index
    %c0_133 = arith.constant 0 : index
    %c0_134 = arith.constant 0 : index
    %171 = vector.load %arg14[%c3_132, %c0_133, %c0_134] : memref<4x128x128xbf16, #tpu.memory_space<vmem>>, vector<1x128x128xbf16>
    %172 = vector.shape_cast %171 : vector<1x128x128xbf16> to vector<128x128xbf16>
    %cst_135 = arith.constant dense<0.000000e+00> : vector<4x128xf32>
    %173 = tpu.matmul %170, %172, %cst_135 {dimension_numbers = #tpu.dot_dimension_numbers<[1], [0], [0], [1], [0, 0, 1, 1], [], []>} : vector<4x128xbf16>, vector<128x128xbf16>, vector<4x128xf32> -> vector<4x128xf32>
    %174 = arith.addf %166, %173 : vector<4x128xf32>
    %c0_136 = arith.constant 0 : index
    %c0_137 = arith.constant 0 : index
    %175 = vector.load %arg15[%c0_136, %c0_137] : memref<128x64xf32, #tpu.memory_space<vmem>>, vector<128x64xf32>
    %cst_138 = arith.constant dense<0.000000e+00> : vector<128xf32>
    %176 = vector.multi_reduction <add>, %174, %cst_138 [0] : vector<4x128xf32> to vector<128xf32>
    %177 = vector.shape_cast %176 : vector<128xf32> to vector<1x128xf32>
    %cst_139 = arith.constant dense<0.000000e+00> : vector<1x64xf32>
    %178 = tpu.matmul %177, %175, %cst_139 {dimension_numbers = #tpu.dot_dimension_numbers<[1], [0], [0], [1], [0, 0, 1, 1], [], []>} : vector<1x128xf32>, vector<128x64xf32>, vector<1x64xf32> -> vector<1x64xf32>
    %179 = arith.mulf %174, %174 : vector<4x128xf32>
    %cst_140 = arith.constant dense<0.000000e+00> : vector<128xf32>
    %180 = vector.multi_reduction <add>, %179, %cst_140 [0] : vector<4x128xf32> to vector<128xf32>
    %181 = vector.shape_cast %180 : vector<128xf32> to vector<1x128xf32>
    %cst_141 = arith.constant dense<0.000000e+00> : vector<1x64xf32>
    %182 = tpu.matmul %181, %175, %cst_141 {dimension_numbers = #tpu.dot_dimension_numbers<[1], [0], [0], [1], [0, 0, 1, 1], [], []>} : vector<1x128xf32>, vector<128x64xf32>, vector<1x64xf32> -> vector<1x64xf32>
    %cst_142 = arith.constant 1.250000e-01 : f32
    %183 = vector.broadcast %cst_142 : f32 to vector<1x64xf32>
    %184 = arith.mulf %178, %183 : vector<1x64xf32>
    %cst_143 = arith.constant 1.250000e-01 : f32
    %185 = vector.broadcast %cst_143 : f32 to vector<1x64xf32>
    %186 = arith.mulf %182, %185 : vector<1x64xf32>
    %187 = arith.mulf %184, %184 : vector<1x64xf32>
    %188 = arith.subf %186, %187 : vector<1x64xf32>
    %cst_144 = arith.constant 0.000000e+00 : f32
    %189 = vector.broadcast %cst_144 : f32 to vector<1x64xf32>
    %190 = arith.maximumf %188, %189 : vector<1x64xf32>
    %c0_145 = arith.constant 0 : index
    %c0_146 = arith.constant 0 : index
    %191 = vector.load %arg17[%c0_145, %c0_146] : memref<1x64xf32, #tpu.memory_space<vmem>>, vector<1x64xf32>
    %cst_147 = arith.constant 9.99999974E-6 : f32
    %192 = vector.broadcast %cst_147 : f32 to vector<1x64xf32>
    %193 = arith.addf %190, %192 : vector<1x64xf32>
    %194 = math.rsqrt %193 : vector<1x64xf32>
    %195 = arith.mulf %191, %194 : vector<1x64xf32>
    %c0_148 = arith.constant 0 : index
    %c0_149 = arith.constant 0 : index
    %196 = vector.load %arg18[%c0_148, %c0_149] : memref<1x64xf32, #tpu.memory_space<vmem>>, vector<1x64xf32>
    %197 = arith.mulf %184, %195 : vector<1x64xf32>
    %198 = arith.subf %196, %197 : vector<1x64xf32>
    %c0_150 = arith.constant 0 : index
    %c0_151 = arith.constant 0 : index
    %199 = vector.load %arg16[%c0_150, %c0_151] : memref<64x128xf32, #tpu.memory_space<vmem>>, vector<64x128xf32>
    %cst_152 = arith.constant dense<0.000000e+00> : vector<1x128xf32>
    %200 = tpu.matmul %195, %199, %cst_152 {dimension_numbers = #tpu.dot_dimension_numbers<[1], [0], [0], [1], [0, 0, 1, 1], [], []>} : vector<1x64xf32>, vector<64x128xf32>, vector<1x128xf32> -> vector<1x128xf32>
    %201 = vector.broadcast %200 : vector<1x128xf32> to vector<4x128xf32>
    %202 = arith.mulf %174, %201 : vector<4x128xf32>
    %cst_153 = arith.constant dense<0.000000e+00> : vector<1x128xf32>
    %203 = tpu.matmul %198, %199, %cst_153 {dimension_numbers = #tpu.dot_dimension_numbers<[1], [0], [0], [1], [0, 0, 1, 1], [], []>} : vector<1x64xf32>, vector<64x128xf32>, vector<1x128xf32> -> vector<1x128xf32>
    %204 = vector.broadcast %203 : vector<1x128xf32> to vector<4x128xf32>
    %205 = arith.addf %202, %204 : vector<4x128xf32>
    %cst_154 = arith.constant 0.000000e+00 : f32
    %206 = vector.broadcast %cst_154 : f32 to vector<4x128xf32>
    %207 = arith.cmpf oge, %205, %206 : vector<4x128xf32>
    %cst_155 = arith.constant 2.000000e-01 : f32
    %208 = vector.broadcast %cst_155 : f32 to vector<4x128xf32>
    %209 = arith.mulf %208, %205 : vector<4x128xf32>
    %210 = arith.select %207, %205, %209 : vector<4x128xi1>, vector<4x128xf32>
    %211 = arith.truncf %210 : vector<4x128xf32> to vector<4x128xbf16>
    %cst_156 = arith.constant 0.000000e+00 : f32
    %212 = vector.broadcast %cst_156 : f32 to vector<2x32xf32>
    %c0_157 = arith.constant 0 : index
    %c0_158 = arith.constant 0 : index
    %c0_159 = arith.constant 0 : index
    %213 = vector.load %arg19[%c0_157, %c0_158, %c0_159] : memref<4x2x4xbf16, #tpu.memory_space<vmem>>, vector<1x2x4xbf16>
    %214 = vector.shape_cast %213 : vector<1x2x4xbf16> to vector<2x4xbf16>
    %cst_160 = arith.constant dense<0.000000e+00> : vector<2x128xf32>
    %215 = tpu.matmul %214, %211, %cst_160 {dimension_numbers = #tpu.dot_dimension_numbers<[1], [0], [0], [1], [0, 0, 1, 1], [], []>} : vector<2x4xbf16>, vector<4x128xbf16>, vector<2x128xf32> -> vector<2x128xf32>
    %216 = arith.truncf %215 : vector<2x128xf32> to vector<2x128xbf16>
    %c0_161 = arith.constant 0 : index
    %c0_162 = arith.constant 0 : index
    %c0_163 = arith.constant 0 : index
    %217 = vector.load %arg20[%c0_161, %c0_162, %c0_163] : memref<4x128x32xbf16, #tpu.memory_space<vmem>>, vector<1x128x32xbf16>
    %218 = vector.shape_cast %217 : vector<1x128x32xbf16> to vector<128x32xbf16>
    %cst_164 = arith.constant dense<0.000000e+00> : vector<2x32xf32>
    %219 = tpu.matmul %216, %218, %cst_164 {dimension_numbers = #tpu.dot_dimension_numbers<[1], [0], [0], [1], [0, 0, 1, 1], [], []>} : vector<2x128xbf16>, vector<128x32xbf16>, vector<2x32xf32> -> vector<2x32xf32>
    %220 = arith.addf %212, %219 : vector<2x32xf32>
    %c1_165 = arith.constant 1 : index
    %c0_166 = arith.constant 0 : index
    %c0_167 = arith.constant 0 : index
    %221 = vector.load %arg19[%c1_165, %c0_166, %c0_167] : memref<4x2x4xbf16, #tpu.memory_space<vmem>>, vector<1x2x4xbf16>
    %222 = vector.shape_cast %221 : vector<1x2x4xbf16> to vector<2x4xbf16>
    %cst_168 = arith.constant dense<0.000000e+00> : vector<2x128xf32>
    %223 = tpu.matmul %222, %211, %cst_168 {dimension_numbers = #tpu.dot_dimension_numbers<[1], [0], [0], [1], [0, 0, 1, 1], [], []>} : vector<2x4xbf16>, vector<4x128xbf16>, vector<2x128xf32> -> vector<2x128xf32>
    %224 = arith.truncf %223 : vector<2x128xf32> to vector<2x128xbf16>
    %c1_169 = arith.constant 1 : index
    %c0_170 = arith.constant 0 : index
    %c0_171 = arith.constant 0 : index
    %225 = vector.load %arg20[%c1_169, %c0_170, %c0_171] : memref<4x128x32xbf16, #tpu.memory_space<vmem>>, vector<1x128x32xbf16>
    %226 = vector.shape_cast %225 : vector<1x128x32xbf16> to vector<128x32xbf16>
    %cst_172 = arith.constant dense<0.000000e+00> : vector<2x32xf32>
    %227 = tpu.matmul %224, %226, %cst_172 {dimension_numbers = #tpu.dot_dimension_numbers<[1], [0], [0], [1], [0, 0, 1, 1], [], []>} : vector<2x128xbf16>, vector<128x32xbf16>, vector<2x32xf32> -> vector<2x32xf32>
    %228 = arith.addf %220, %227 : vector<2x32xf32>
    %c2_173 = arith.constant 2 : index
    %c0_174 = arith.constant 0 : index
    %c0_175 = arith.constant 0 : index
    %229 = vector.load %arg19[%c2_173, %c0_174, %c0_175] : memref<4x2x4xbf16, #tpu.memory_space<vmem>>, vector<1x2x4xbf16>
    %230 = vector.shape_cast %229 : vector<1x2x4xbf16> to vector<2x4xbf16>
    %cst_176 = arith.constant dense<0.000000e+00> : vector<2x128xf32>
    %231 = tpu.matmul %230, %211, %cst_176 {dimension_numbers = #tpu.dot_dimension_numbers<[1], [0], [0], [1], [0, 0, 1, 1], [], []>} : vector<2x4xbf16>, vector<4x128xbf16>, vector<2x128xf32> -> vector<2x128xf32>
    %232 = arith.truncf %231 : vector<2x128xf32> to vector<2x128xbf16>
    %c2_177 = arith.constant 2 : index
    %c0_178 = arith.constant 0 : index
    %c0_179 = arith.constant 0 : index
    %233 = vector.load %arg20[%c2_177, %c0_178, %c0_179] : memref<4x128x32xbf16, #tpu.memory_space<vmem>>, vector<1x128x32xbf16>
    %234 = vector.shape_cast %233 : vector<1x128x32xbf16> to vector<128x32xbf16>
    %cst_180 = arith.constant dense<0.000000e+00> : vector<2x32xf32>
    %235 = tpu.matmul %232, %234, %cst_180 {dimension_numbers = #tpu.dot_dimension_numbers<[1], [0], [0], [1], [0, 0, 1, 1], [], []>} : vector<2x128xbf16>, vector<128x32xbf16>, vector<2x32xf32> -> vector<2x32xf32>
    %236 = arith.addf %228, %235 : vector<2x32xf32>
    %c3_181 = arith.constant 3 : index
    %c0_182 = arith.constant 0 : index
    %c0_183 = arith.constant 0 : index
    %237 = vector.load %arg19[%c3_181, %c0_182, %c0_183] : memref<4x2x4xbf16, #tpu.memory_space<vmem>>, vector<1x2x4xbf16>
    %238 = vector.shape_cast %237 : vector<1x2x4xbf16> to vector<2x4xbf16>
    %cst_184 = arith.constant dense<0.000000e+00> : vector<2x128xf32>
    %239 = tpu.matmul %238, %211, %cst_184 {dimension_numbers = #tpu.dot_dimension_numbers<[1], [0], [0], [1], [0, 0, 1, 1], [], []>} : vector<2x4xbf16>, vector<4x128xbf16>, vector<2x128xf32> -> vector<2x128xf32>
    %240 = arith.truncf %239 : vector<2x128xf32> to vector<2x128xbf16>
    %c3_185 = arith.constant 3 : index
    %c0_186 = arith.constant 0 : index
    %c0_187 = arith.constant 0 : index
    %241 = vector.load %arg20[%c3_185, %c0_186, %c0_187] : memref<4x128x32xbf16, #tpu.memory_space<vmem>>, vector<1x128x32xbf16>
    %242 = vector.shape_cast %241 : vector<1x128x32xbf16> to vector<128x32xbf16>
    %cst_188 = arith.constant dense<0.000000e+00> : vector<2x32xf32>
    %243 = tpu.matmul %240, %242, %cst_188 {dimension_numbers = #tpu.dot_dimension_numbers<[1], [0], [0], [1], [0, 0, 1, 1], [], []>} : vector<2x128xbf16>, vector<128x32xbf16>, vector<2x32xf32> -> vector<2x32xf32>
    %244 = arith.addf %236, %243 : vector<2x32xf32>
    %c0_189 = arith.constant 0 : index
    %c0_190 = arith.constant 0 : index
    %245 = vector.load %arg21[%c0_189, %c0_190] : memref<32x32xf32, #tpu.memory_space<vmem>>, vector<32x32xf32>
    %cst_191 = arith.constant dense<0.000000e+00> : vector<32xf32>
    %246 = vector.multi_reduction <add>, %244, %cst_191 [0] : vector<2x32xf32> to vector<32xf32>
    %247 = vector.shape_cast %246 : vector<32xf32> to vector<1x32xf32>
    %cst_192 = arith.constant dense<0.000000e+00> : vector<1x32xf32>
    %248 = tpu.matmul %247, %245, %cst_192 {dimension_numbers = #tpu.dot_dimension_numbers<[1], [0], [0], [1], [0, 0, 1, 1], [], []>} : vector<1x32xf32>, vector<32x32xf32>, vector<1x32xf32> -> vector<1x32xf32>
    %249 = arith.mulf %244, %244 : vector<2x32xf32>
    %cst_193 = arith.constant dense<0.000000e+00> : vector<32xf32>
    %250 = vector.multi_reduction <add>, %249, %cst_193 [0] : vector<2x32xf32> to vector<32xf32>
    %251 = vector.shape_cast %250 : vector<32xf32> to vector<1x32xf32>
    %cst_194 = arith.constant dense<0.000000e+00> : vector<1x32xf32>
    %252 = tpu.matmul %251, %245, %cst_194 {dimension_numbers = #tpu.dot_dimension_numbers<[1], [0], [0], [1], [0, 0, 1, 1], [], []>} : vector<1x32xf32>, vector<32x32xf32>, vector<1x32xf32> -> vector<1x32xf32>
    %cst_195 = arith.constant 5.000000e-01 : f32
    %253 = vector.broadcast %cst_195 : f32 to vector<1x32xf32>
    %254 = arith.mulf %248, %253 : vector<1x32xf32>
    %cst_196 = arith.constant 5.000000e-01 : f32
    %255 = vector.broadcast %cst_196 : f32 to vector<1x32xf32>
    %256 = arith.mulf %252, %255 : vector<1x32xf32>
    %257 = arith.mulf %254, %254 : vector<1x32xf32>
    %258 = arith.subf %256, %257 : vector<1x32xf32>
    %cst_197 = arith.constant 0.000000e+00 : f32
    %259 = vector.broadcast %cst_197 : f32 to vector<1x32xf32>
    %260 = arith.maximumf %258, %259 : vector<1x32xf32>
    %c0_198 = arith.constant 0 : index
    %c0_199 = arith.constant 0 : index
    %261 = vector.load %arg23[%c0_198, %c0_199] : memref<1x32xf32, #tpu.memory_space<vmem>>, vector<1x32xf32>
    %cst_200 = arith.constant 9.99999974E-6 : f32
    %262 = vector.broadcast %cst_200 : f32 to vector<1x32xf32>
    %263 = arith.addf %260, %262 : vector<1x32xf32>
    %264 = math.rsqrt %263 : vector<1x32xf32>
    %265 = arith.mulf %261, %264 : vector<1x32xf32>
    %c0_201 = arith.constant 0 : index
    %c0_202 = arith.constant 0 : index
    %266 = vector.load %arg24[%c0_201, %c0_202] : memref<1x32xf32, #tpu.memory_space<vmem>>, vector<1x32xf32>
    %267 = arith.mulf %254, %265 : vector<1x32xf32>
    %268 = arith.subf %266, %267 : vector<1x32xf32>
    %c0_203 = arith.constant 0 : index
    %c0_204 = arith.constant 0 : index
    %269 = vector.load %arg22[%c0_203, %c0_204] : memref<32x32xf32, #tpu.memory_space<vmem>>, vector<32x32xf32>
    %cst_205 = arith.constant dense<0.000000e+00> : vector<1x32xf32>
    %270 = tpu.matmul %265, %269, %cst_205 {dimension_numbers = #tpu.dot_dimension_numbers<[1], [0], [0], [1], [0, 0, 1, 1], [], []>} : vector<1x32xf32>, vector<32x32xf32>, vector<1x32xf32> -> vector<1x32xf32>
    %271 = vector.broadcast %270 : vector<1x32xf32> to vector<2x32xf32>
    %272 = arith.mulf %244, %271 : vector<2x32xf32>
    %cst_206 = arith.constant dense<0.000000e+00> : vector<1x32xf32>
    %273 = tpu.matmul %268, %269, %cst_206 {dimension_numbers = #tpu.dot_dimension_numbers<[1], [0], [0], [1], [0, 0, 1, 1], [], []>} : vector<1x32xf32>, vector<32x32xf32>, vector<1x32xf32> -> vector<1x32xf32>
    %274 = vector.broadcast %273 : vector<1x32xf32> to vector<2x32xf32>
    %275 = arith.addf %272, %274 : vector<2x32xf32>
    %276 = math.tanh %275 : vector<2x32xf32>
    %c0_207 = arith.constant 0 : index
    %c0_208 = arith.constant 0 : index
    %277 = vector.load %arg25[%c0_207, %c0_208] : memref<2x32xf32, #tpu.memory_space<vmem>>, vector<2x32xf32>
    tpu.vector_store %arg25[%c0_207, %c0_208], %276 {strides = array<i32>} : memref<2x32xf32, #tpu.memory_space<vmem>>, vector<2x32xf32>,
    return
  }
}

</mosaic_0001>

<llo_original>
// kernel: encoder_forward.1
$region0: #{encoder_forward.1}
  #allocation0 [shape = 'u32[]', space=smem, size = 0x4, offset = 0x4, fixed_abs, tag = 'smem constant byte address 0x4 - core index']
  #allocation1 [shape = 'u32[72,128]{1,0:T(1,128)}', space=vmem, size = 0x9000, scoped, tag = 'internal scratch']
  %s0 = inlined_call_operand.vmem [shape: f32[32,64], index: 0, kind: input, shape index: {}]
  %s1 = inlined_call_operand.vmem [shape: bf16[4,16,32], index: 1, kind: input, shape index: {}]
  %s2 = inlined_call_operand.vmem [shape: bf16[4,64,128], index: 2, kind: input, shape index: {}]
  %s3 = inlined_call_operand.vmem [shape: f32[128,16], index: 3, kind: input, shape index: {}]
  %s4 = inlined_call_operand.vmem [shape: f32[16,128], index: 4, kind: input, shape index: {}]
  %s5 = inlined_call_operand.vmem [shape: f32[1,16], index: 5, kind: input, shape index: {}]
  %s6 = inlined_call_operand.vmem [shape: f32[1,16], index: 6, kind: input, shape index: {}]
  %s7 = inlined_call_operand.vmem [shape: bf16[4,8,16], index: 7, kind: input, shape index: {}]
  %s8 = inlined_call_operand.vmem [shape: bf16[4,128,128], index: 8, kind: input, shape index: {}]
  %s9 = inlined_call_operand.vmem [shape: f32[128,32], index: 9, kind: input, shape index: {}]
  %s10 = inlined_call_operand.vmem [shape: f32[32,128], index: 10, kind: input, shape index: {}]
  %s11 = inlined_call_operand.vmem [shape: f32[1,32], index: 11, kind: input, shape index: {}]
  %s12 = inlined_call_operand.vmem [shape: f32[1,32], index: 12, kind: input, shape index: {}]
  %s13 = inlined_call_operand.vmem [shape: bf16[4,4,8], index: 13, kind: input, shape index: {}]
  %s14 = inlined_call_operand.vmem [shape: bf16[4,128,128], index: 14, kind: input, shape index: {}]
  %s15 = inlined_call_operand.vmem [shape: f32[128,64], index: 15, kind: input, shape index: {}]
  %s16 = inlined_call_operand.vmem [shape: f32[64,128], index: 16, kind: input, shape index: {}]
  %s17 = inlined_call_operand.vmem [shape: f32[1,64], index: 17, kind: input, shape index: {}]
  %s18 = inlined_call_operand.vmem [shape: f32[1,64], index: 18, kind: input, shape index: {}]
  %s19 = inlined_call_operand.vmem [shape: bf16[4,2,4], index: 19, kind: input, shape index: {}]
  %s20 = inlined_call_operand.vmem [shape: bf16[4,128,32], index: 20, kind: input, shape index: {}]
  %s21 = inlined_call_operand.vmem [shape: f32[32,32], index: 21, kind: input, shape index: {}, may-alias: {21,22}]
  %s22 = inlined_call_operand.vmem [shape: f32[32,32], index: 22, kind: input, shape index: {}, may-alias: {21,22}]
  %s23 = inlined_call_operand.vmem [shape: f32[1,32], index: 23, kind: input, shape index: {}]
  %s24 = inlined_call_operand.vmem [shape: f32[1,32], index: 24, kind: input, shape index: {}]
  %s25 = inlined_call_operand.hbm [shape: f32[2,32], index: 25, kind: output, shape index: {}]
  %s26 = sld [smem:[#allocation0]]
  $region110: #{encoder_forward.1} parent=0
    _
  %s28 = ssub.s32 1, %s26
  %s29 = scalar_select 0, %s28, %s26
  $region1: #{encoder_forward.1} parent=0
    #allocation2 [shape = 'u8[1024]{0}', space=vmem, size = 0x400, scoped, tag = 'output window, operand 0, single buffered']
    #allocation3 [shape = 's32[1]{0}', space=sflag, size = 0x4, scoped, tag = 'scoped memory for encoder_forward.1']
    %30 = vsyncpa [#allocation3], 0
    // Predicated region
    $region2: #{encoder_forward.1} parent=1 // pred_check
      _
    $region3: #{encoder_forward.1} parent=1 // pred_check_branch
      %32 = sbr.rel (0) target = $region5
    $region4: #{encoder_forward.1} parent=1 // pred_region
      _
    $region5: #{encoder_forward.1} parent=1 // pred_fallthru
      _
    // Predicated region
    $region6: #{encoder_forward.1} parent=1 // pred_check
      _
    $region7: #{encoder_forward.1} parent=1 // pred_check_branch
      %34 = sbr.rel (0) target = $region9
    $region8: #{encoder_forward.1} parent=1 // pred_region
      _
    $region9: #{encoder_forward.1} parent=1 // pred_fallthru
      _
    // Predicated region
    $region10: #{encoder_forward.1} parent=1 // pred_check
      _
    $region11: #{encoder_forward.1} parent=1 // pred_check_branch
      %36 = sbr.rel (0) target = $region13
    $region12: #{encoder_forward.1} parent=1 // pred_region
      _
    $region13: #{encoder_forward.1} parent=1 // pred_fallthru
      _
    // Predicated region
    $region14: #{encoder_forward.1} parent=1 // pred_check
      _
    $region15: #{encoder_forward.1} parent=1 // pred_check_branch
      %38 = sbr.rel (0) target = $region17
    $region16: #{encoder_forward.1} parent=1 // pred_region
      _
    $region17: #{encoder_forward.1} parent=1 // pred_fallthru
      _
    // Predicated region
    $region18: #{encoder_forward.1} parent=1 // pred_check
      _
    $region19: #{encoder_forward.1} parent=1 // pred_check_branch
      %40 = sbr.rel (0) target = $region21
    $region20: #{encoder_forward.1} parent=1 // pred_region
      _
    $region21: #{encoder_forward.1} parent=1 // pred_fallthru
      _
    // Predicated region
    $region22: #{encoder_forward.1} parent=1 // pred_check
      _
    $region23: #{encoder_forward.1} parent=1 // pred_check_branch
      %42 = sbr.rel (0) target = $region25
    $region24: #{encoder_forward.1} parent=1 // pred_region
      _
    $region25: #{encoder_forward.1} parent=1 // pred_fallthru
      _
    // Predicated region
    $region26: #{encoder_forward.1} parent=1 // pred_check
      _
    $region27: #{encoder_forward.1} parent=1 // pred_check_branch
      %44 = sbr.rel (0) target = $region29
    $region28: #{encoder_forward.1} parent=1 // pred_region
      _
    $region29: #{encoder_forward.1} parent=1 // pred_fallthru
      _
    // Predicated region
    $region30: #{encoder_forward.1} parent=1 // pred_check
      _
    $region31: #{encoder_forward.1} parent=1 // pred_check_branch
      %46 = sbr.rel (0) target = $region33
    $region32: #{encoder_forward.1} parent=1 // pred_region
      _
    $region33: #{encoder_forward.1} parent=1 // pred_fallthru
      _
    // Predicated region
    $region34: #{encoder_forward.1} parent=1 // pred_check
      _
    $region35: #{encoder_forward.1} parent=1 // pred_check_branch
      %48 = sbr.rel (0) target = $region37
    $region36: #{encoder_forward.1} parent=1 // pred_region
      _
    $region37: #{encoder_forward.1} parent=1 // pred_fallthru
      _
    // Predicated region
    $region38: #{encoder_forward.1} parent=1 // pred_check
      _
    $region39: #{encoder_forward.1} parent=1 // pred_check_branch
      %50 = sbr.rel (0) target = $region41
    $region40: #{encoder_forward.1} parent=1 // pred_region
      _
    $region41: #{encoder_forward.1} parent=1 // pred_fallthru
      _
    // Predicated region
    $region42: #{encoder_forward.1} parent=1 // pred_check
      _
    $region43: #{encoder_forward.1} parent=1 // pred_check_branch
      %52 = sbr.rel (0) target = $region45
    $region44: #{encoder_forward.1} parent=1 // pred_region
      _
    $region45: #{encoder_forward.1} parent=1 // pred_fallthru
      _
    // Predicated region
    $region46: #{encoder_forward.1} parent=1 // pred_check
      _
    $region47: #{encoder_forward.1} parent=1 // pred_check_branch
      %54 = sbr.rel (0) target = $region49
    $region48: #{encoder_forward.1} parent=1 // pred_region
      _
    $region49: #{encoder_forward.1} parent=1 // pred_fallthru
      _
    // Predicated region
    $region50: #{encoder_forward.1} parent=1 // pred_check
      _
    $region51: #{encoder_forward.1} parent=1 // pred_check_branch
      %56 = sbr.rel (0) target = $region53
    $region52: #{encoder_forward.1} parent=1 // pred_region
      _
    $region53: #{encoder_forward.1} parent=1 // pred_fallthru
      _
    // Predicated region
    $region54: #{encoder_forward.1} parent=1 // pred_check
      _
    $region55: #{encoder_forward.1} parent=1 // pred_check_branch
      %58 = sbr.rel (0) target = $region57
    $region56: #{encoder_forward.1} parent=1 // pred_region
      _
    $region57: #{encoder_forward.1} parent=1 // pred_fallthru
      _
    // Predicated region
    $region58: #{encoder_forward.1} parent=1 // pred_check
      _
    $region59: #{encoder_forward.1} parent=1 // pred_check_branch
      %60 = sbr.rel (0) target = $region61
    $region60: #{encoder_forward.1} parent=1 // pred_region
      _
    $region61: #{encoder_forward.1} parent=1 // pred_fallthru
      _
    // Predicated region
    $region62: #{encoder_forward.1} parent=1 // pred_check
      _
    $region63: #{encoder_forward.1} parent=1 // pred_check_branch
      %62 = sbr.rel (0) target = $region65
    $region64: #{encoder_forward.1} parent=1 // pred_region
      _
    $region65: #{encoder_forward.1} parent=1 // pred_fallthru
      _
    // Predicated region
    $region66: #{encoder_forward.1} parent=1 // pred_check
      _
    $region67: #{encoder_forward.1} parent=1 // pred_check_branch
      %64 = sbr.rel (0) target = $region69
    $region68: #{encoder_forward.1} parent=1 // pred_region
      _
    $region69: #{encoder_forward.1} parent=1 // pred_fallthru
      _
    // Predicated region
    $region70: #{encoder_forward.1} parent=1 // pred_check
      _
    $region71: #{encoder_forward.1} parent=1 // pred_check_branch
      %66 = sbr.rel (0) target = $region73
    $region72: #{encoder_forward.1} parent=1 // pred_region
      _
    $region73: #{encoder_forward.1} parent=1 // pred_fallthru
      _
    // Predicated region
    $region74: #{encoder_forward.1} parent=1 // pred_check
      _
    $region75: #{encoder_forward.1} parent=1 // pred_check_branch
      %68 = sbr.rel (0) target = $region77
    $region76: #{encoder_forward.1} parent=1 // pred_region
      _
    $region77: #{encoder_forward.1} parent=1 // pred_fallthru
      _
    // Predicated region
    $region78: #{encoder_forward.1} parent=1 // pred_check
      _
    $region79: #{encoder_forward.1} parent=1 // pred_check_branch
      %70 = sbr.rel (0) target = $region81
    $region80: #{encoder_forward.1} parent=1 // pred_region
      _
    $region81: #{encoder_forward.1} parent=1 // pred_fallthru
      _
    // Predicated region
    $region82: #{encoder_forward.1} parent=1 // pred_check
      _
    $region83: #{encoder_forward.1} parent=1 // pred_check_branch
      %72 = sbr.rel (0) target = $region85
    $region84: #{encoder_forward.1} parent=1 // pred_region
      _
    $region85: #{encoder_forward.1} parent=1 // pred_fallthru
      _
    // Predicated region
    $region86: #{encoder_forward.1} parent=1 // pred_check
      _
    $region87: #{encoder_forward.1} parent=1 // pred_check_branch
      %74 = sbr.rel (0) target = $region89
    $region88: #{encoder_forward.1} parent=1 // pred_region
      _
    $region89: #{encoder_forward.1} parent=1 // pred_fallthru
      _
    // Predicated region
    $region90: #{encoder_forward.1} parent=1 // pred_check
      _
    $region91: #{encoder_forward.1} parent=1 // pred_check_branch
      %76 = sbr.rel (0) target = $region93
    $region92: #{encoder_forward.1} parent=1 // pred_region
      _
    $region93: #{encoder_forward.1} parent=1 // pred_fallthru
      _
    // Predicated region
    $region94: #{encoder_forward.1} parent=1 // pred_check
      _
    $region95: #{encoder_forward.1} parent=1 // pred_check_branch
      %78 = sbr.rel (0) target = $region97
    $region96: #{encoder_forward.1} parent=1 // pred_region
      _
    $region97: #{encoder_forward.1} parent=1 // pred_fallthru
      _
    // Predicated region
    $region98: #{encoder_forward.1} parent=1 // pred_check
      _
    $region99: #{encoder_forward.1} parent=1 // pred_check_branch
      %80 = sbr.rel (0) target = $region101
    $region100: #{encoder_forward.1} parent=1 // pred_region
      _
    $region101: #{encoder_forward.1} parent=1 // pred_fallthru
      _
    %v82 = vld [vmem:[%s0] sm:$0xff]
    %v83 = vld [vmem:[%s0 + $0x8] sm:$0xff]
    %v84 = vld [vmem:[%s0 + $0x10] sm:$0xff]
    %v85 = vld [vmem:[%s0 + $0x18] sm:$0xff]
    %v86 = vpack.c.bf16 %v83, %v82
    %v87 = vpack.c.bf16 %v85, %v84
    %v88 = vld [vmem:[%s1] sm:$0xf]
    %v89 = vld [vmem:[%s1 + $0x4] sm:$0xf]
    %v92 = vunpack.c.l.b16 %v88
    %v93 = vunpack.c.l.b16 %v89
    %v94 = vpack.c.b16 %v93, %v92
    %vm95 = vcmask 261120
    %v97 = vsel %vm95, %v94, 0
    %99 = vmatpush.bf16.msra.mxu0 0
    %100 = vmatpush.bf16.msra.mxu0 0
    %101 = vmatpush.bf16.msra.mxu0 0
    %102 = vmatpush.bf16.msra.mxu0 0
    %103 = vmatpush.bf16.msra.mxu0 0
    %104 = vmatpush.bf16.msra.mxu0 0
    %105 = vmatpush.bf16.msra.mxu0 %v87
    %106 = vmatpush.bf16.msra.mxu0 %v86
    %107 = vmatmul.bf16.gmra.mxu0 %v97
    %v108 = vpop.f32.mrf.mxu0
    %v109 = vadd.f32 0.0, %v108
    %v110 = vpop.f32.mrf.mxu0
    %v111 = vadd.f32 0.0, %v110
    %112 = vdwg.mxu0
    %v113 = vpack.c.bf16 %v111, %v109
    %v114 = vld [vmem:[%s2] sm:$0xf]
    %v115 = vld [vmem:[%s2 + $0x4] sm:$0xf]
    %v116 = vld [vmem:[%s2 + $0x8] sm:$0xf]
    %v117 = vld [vmem:[%s2 + $0xc] sm:$0xf]
    %v118 = vld [vmem:[%s2 + $0x10] sm:$0xf]
    %v119 = vld [vmem:[%s2 + $0x14] sm:$0xf]
    %v120 = vld [vmem:[%s2 + $0x18] sm:$0xf]
    %v121 = vld [vmem:[%s2 + $0x1c] sm:$0xf]
    %s122 = scalar_lea.vmem %s1, 8
    %v123 = vld [vmem:[%s122] sm:$0xf]
    %v124 = vld [vmem:[%s122 + $0x4] sm:$0xf]
    %v127 = vunpack.c.l.b16 %v123
    %v128 = vunpack.c.l.b16 %v124
    %v129 = vpack.c.b16 %v128, %v127
    %v131 = vsel %vm95, %v129, 0
    %133 = vmatpush.bf16.msra.mxu0 0
    %134 = vmatpush.bf16.msra.mxu0 0
    %135 = vmatpush.bf16.msra.mxu0 0
    %136 = vmatpush.bf16.msra.mxu0 0
    %137 = vmatpush.bf16.msra.mxu0 0
    %138 = vmatpush.bf16.msra.mxu0 0
    %139 = vmatpush.bf16.msra.mxu0 %v87
    %140 = vmatpush.bf16.msra.mxu0 %v86
    %141 = vmatmul.bf16.gmra.mxu0 %v131
    %v142 = vpop.f32.mrf.mxu0
    %v143 = vadd.f32 0.0, %v142
    %v144 = vpop.f32.mrf.mxu0
    %v145 = vadd.f32 0.0, %v144
    %146 = vdwg.mxu0
    %v147 = vpack.c.bf16 %v145, %v143
    %s148 = scalar_lea.vmem %s2, 32
    %v149 = vld [vmem:[%s148] sm:$0xf]
    %v150 = vld [vmem:[%s148 + $0x4] sm:$0xf]
    %v151 = vld [vmem:[%s148 + $0x8] sm:$0xf]
    %v152 = vld [vmem:[%s148 + $0xc] sm:$0xf]
    %v153 = vld [vmem:[%s148 + $0x10] sm:$0xf]
    %v154 = vld [vmem:[%s148 + $0x14] sm:$0xf]
    %v155 = vld [vmem:[%s148 + $0x18] sm:$0xf]
    %v156 = vld [vmem:[%s148 + $0x1c] sm:$0xf]
    %v165 = vunpack.c.l.b16 %v149
    %v166 = vunpack.c.l.b16 %v150
    %v167 = vunpack.c.l.b16 %v151
    %v168 = vunpack.c.l.b16 %v152
    %v169 = vunpack.c.l.b16 %v153
    %v170 = vunpack.c.l.b16 %v154
    %v171 = vunpack.c.l.b16 %v155
    %v172 = vunpack.c.l.b16 %v156
    %v173 = vpack.c.b16 %v166, %v165
    %v174 = vpack.c.b16 %v168, %v167
    %v175 = vpack.c.b16 %v170, %v169
    %v176 = vpack.c.b16 %v172, %v171
    %vm181 = vcmask 523264
    %v183 = vsel %vm181, %v147, 0
    %185 = vmatpush.bf16.msra.mxu0 0
    %186 = vmatpush.bf16.msra.mxu0 0
    %187 = vmatpush.bf16.msra.mxu0 0
    %188 = vmatpush.bf16.msra.mxu0 0
    %189 = vmatpush.bf16.msra.mxu0 %v176
    %190 = vmatpush.bf16.msra.mxu0 %v175
    %191 = vmatpush.bf16.msra.mxu0 %v174
    %192 = vmatpush.bf16.msra.mxu0 %v173
    %193 = vmatmul.bf16.gmra.mxu0 %v183
    %v194 = vpop.f32.mrf.mxu0
    %v195 = vadd.f32 0.0, %v194
    %v196 = vpop.f32.mrf.mxu0
    %v197 = vadd.f32 0.0, %v196
    %198 = vdwg.mxu0
    %v207 = vunpack.c.l.b16 %v114
    %v208 = vunpack.c.l.b16 %v115
    %v209 = vunpack.c.l.b16 %v116
    %v210 = vunpack.c.l.b16 %v117
    %v211 = vunpack.c.l.b16 %v118
    %v212 = vunpack.c.l.b16 %v119
    %v213 = vunpack.c.l.b16 %v120
    %v214 = vunpack.c.l.b16 %v121
    %v215 = vpack.c.b16 %v208, %v207
    %v216 = vpack.c.b16 %v210, %v209
    %v217 = vpack.c.b16 %v212, %v211
    %v218 = vpack.c.b16 %v214, %v213
    %v224 = vsel %vm181, %v113, 0
    %226 = vmatpush.bf16.msra.mxu0 0
    %227 = vmatpush.bf16.msra.mxu0 0
    %228 = vmatpush.bf16.msra.mxu0 0
    %229 = vmatpush.bf16.msra.mxu0 0
    %230 = vmatpush.bf16.msra.mxu0 %v218
    %231 = vmatpush.bf16.msra.mxu0 %v217
    %232 = vmatpush.bf16.msra.mxu0 %v216
    %233 = vmatpush.bf16.msra.mxu0 %v215
    %234 = vmatmul.bf16.gmra.mxu0 %v224
    %v235 = vpop.f32.mrf.mxu0
    %v236 = vadd.f32 %v195, %v235
    %v237 = vpop.f32.mrf.mxu0
    %v238 = vadd.f32 %v197, %v237
    %239 = vdwg.mxu0
    %s240 = scalar_lea.vmem %s1, 16
    %v241 = vld [vmem:[%s240] sm:$0xf]
    %v242 = vld [vmem:[%s240 + $0x4] sm:$0xf]
    %v245 = vunpack.c.l.b16 %v241
    %v246 = vunpack.c.l.b16 %v242
    %v247 = vpack.c.b16 %v246, %v245
    %v249 = vsel %vm95, %v247, 0
    %251 = vmatpush.bf16.msra.mxu0 0
    %252 = vmatpush.bf16.msra.mxu0 0
    %253 = vmatpush.bf16.msra.mxu0 0
    %254 = vmatpush.bf16.msra.mxu0 0
    %255 = vmatpush.bf16.msra.mxu0 0
    %256 = vmatpush.bf16.msra.mxu0 0
    %257 = vmatpush.bf16.msra.mxu0 %v87
    %258 = vmatpush.bf16.msra.mxu0 %v86
    %259 = vmatmul.bf16.gmra.mxu0 %v249
    %v260 = vpop.f32.mrf.mxu0
    %v261 = vadd.f32 0.0, %v260
    %v262 = vpop.f32.mrf.mxu0
    %v263 = vadd.f32 0.0, %v262
    %264 = vdwg.mxu0
    %v265 = vpack.c.bf16 %v263, %v261
    %s266 = scalar_lea.vmem %s2, 64
    %v267 = vld [vmem:[%s266] sm:$0xf]
    %v268 = vld [vmem:[%s266 + $0x4] sm:$0xf]
    %v269 = vld [vmem:[%s266 + $0x8] sm:$0xf]
    %v270 = vld [vmem:[%s266 + $0xc] sm:$0xf]
    %v271 = vld [vmem:[%s266 + $0x10] sm:$0xf]
    %v272 = vld [vmem:[%s266 + $0x14] sm:$0xf]
    %v273 = vld [vmem:[%s266 + $0x18] sm:$0xf]
    %v274 = vld [vmem:[%s266 + $0x1c] sm:$0xf]
    %v283 = vunpack.c.l.b16 %v267
    %v284 = vunpack.c.l.b16 %v268
    %v285 = vunpack.c.l.b16 %v269
    %v286 = vunpack.c.l.b16 %v270
    %v287 = vunpack.c.l.b16 %v271
    %v288 = vunpack.c.l.b16 %v272
    %v289 = vunpack.c.l.b16 %v273
    %v290 = vunpack.c.l.b16 %v274
    %v291 = vpack.c.b16 %v284, %v283
    %v292 = vpack.c.b16 %v286, %v285
    %v293 = vpack.c.b16 %v288, %v287
    %v294 = vpack.c.b16 %v290, %v289
    %v300 = vsel %vm181, %v265, 0
    %302 = vmatpush.bf16.msra.mxu0 0
    %303 = vmatpush.bf16.msra.mxu0 0
    %304 = vmatpush.bf16.msra.mxu0 0
    %305 = vmatpush.bf16.msra.mxu0 0
    %306 = vmatpush.bf16.msra.mxu0 %v294
    %307 = vmatpush.bf16.msra.mxu0 %v293
    %308 = vmatpush.bf16.msra.mxu0 %v292
    %309 = vmatpush.bf16.msra.mxu0 %v291
    %310 = vmatmul.bf16.gmra.mxu0 %v300
    %v311 = vpop.f32.mrf.mxu0
    %v312 = vadd.f32 0.0, %v311
    %v313 = vpop.f32.mrf.mxu0
    %v314 = vadd.f32 0.0, %v313
    %315 = vdwg.mxu0
    %v316 = vadd.f32 %v236, %v312
    %v317 = vadd.f32 %v238, %v314
    %s318 = scalar_lea.vmem %s1, 24
    %v319 = vld [vmem:[%s318] sm:$0xf]
    %v320 = vld [vmem:[%s318 + $0x4] sm:$0xf]
    %v323 = vunpack.c.l.b16 %v319
    %v324 = vunpack.c.l.b16 %v320
    %v325 = vpack.c.b16 %v324, %v323
    %v327 = vsel %vm95, %v325, 0
    %329 = vmatpush.bf16.msra.mxu0 0
    %330 = vmatpush.bf16.msra.mxu0 0
    %331 = vmatpush.bf16.msra.mxu0 0
    %332 = vmatpush.bf16.msra.mxu0 0
    %333 = vmatpush.bf16.msra.mxu0 0
    %334 = vmatpush.bf16.msra.mxu0 0
    %335 = vmatpush.bf16.msra.mxu0 %v87
    %336 = vmatpush.bf16.msra.mxu0 %v86
    %337 = vmatmul.bf16.gmra.mxu0 %v327
    %v338 = vpop.f32.mrf.mxu0
    %v339 = vadd.f32 0.0, %v338
    %v340 = vpop.f32.mrf.mxu0
    %v341 = vadd.f32 0.0, %v340
    %342 = vdwg.mxu0
    %v343 = vpack.c.bf16 %v341, %v339
    %s344 = scalar_lea.vmem %s2, 96
    %v345 = vld [vmem:[%s344] sm:$0xf]
    %v346 = vld [vmem:[%s344 + $0x4] sm:$0xf]
    %v347 = vld [vmem:[%s344 + $0x8] sm:$0xf]
    %v348 = vld [vmem:[%s344 + $0xc] sm:$0xf]
    %v349 = vld [vmem:[%s344 + $0x10] sm:$0xf]
    %v350 = vld [vmem:[%s344 + $0x14] sm:$0xf]
    %v351 = vld [vmem:[%s344 + $0x18] sm:$0xf]
    %v352 = vld [vmem:[%s344 + $0x1c] sm:$0xf]
    %v361 = vunpack.c.l.b16 %v345
    %v362 = vunpack.c.l.b16 %v346
    %v363 = vunpack.c.l.b16 %v347
    %v364 = vunpack.c.l.b16 %v348
    %v365 = vunpack.c.l.b16 %v349
    %v366 = vunpack.c.l.b16 %v350
    %v367 = vunpack.c.l.b16 %v351
    %v368 = vunpack.c.l.b16 %v352
    %v369 = vpack.c.b16 %v362, %v361
    %v370 = vpack.c.b16 %v364, %v363
    %v371 = vpack.c.b16 %v366, %v365
    %v372 = vpack.c.b16 %v368, %v367
    %v378 = vsel %vm181, %v343, 0
    %380 = vmatpush.bf16.msra.mxu0 0
    %381 = vmatpush.bf16.msra.mxu0 0
    %382 = vmatpush.bf16.msra.mxu0 0
    %383 = vmatpush.bf16.msra.mxu0 0
    %384 = vmatpush.bf16.msra.mxu0 %v372
    %385 = vmatpush.bf16.msra.mxu0 %v371
    %386 = vmatpush.bf16.msra.mxu0 %v370
    %387 = vmatpush.bf16.msra.mxu0 %v369
    %388 = vmatmul.bf16.gmra.mxu0 %v378
    %v389 = vpop.f32.mrf.mxu0
    %v390 = vadd.f32 0.0, %v389
    %v391 = vpop.f32.mrf.mxu0
    %v392 = vadd.f32 0.0, %v391
    %393 = vdwg.mxu0
    %v394 = vadd.f32 %v316, %v390
    %v395 = vadd.f32 %v317, %v392
    %v396 = vld [vmem:[%s3] sm:$0xff]
    %v397 = vld [vmem:[%s3 + $0x8] sm:$0xff]
    %v398 = vld [vmem:[%s3 + $0x10] sm:$0xff]
    %v399 = vld [vmem:[%s3 + $0x18] sm:$0xff]
    %v400 = vld [vmem:[%s3 + $0x20] sm:$0xff]
    %v401 = vld [vmem:[%s3 + $0x28] sm:$0xff]
    %v402 = vld [vmem:[%s3 + $0x30] sm:$0xff]
    %v403 = vld [vmem:[%s3 + $0x38] sm:$0xff]
    %v404 = vld [vmem:[%s3 + $0x40] sm:$0xff]
    %v405 = vld [vmem:[%s3 + $0x48] sm:$0xff]
    %v406 = vld [vmem:[%s3 + $0x50] sm:$0xff]
    %v407 = vld [vmem:[%s3 + $0x58] sm:$0xff]
    %v408 = vld [vmem:[%s3 + $0x60] sm:$0xff]
    %v409 = vld [vmem:[%s3 + $0x68] sm:$0xff]
    %v410 = vld [vmem:[%s3 + $0x70] sm:$0xff]
    %v411 = vld [vmem:[%s3 + $0x78] sm:$0xff]
    %v412 = vadd.f32 %v394, %v395
    %v413 = vrot.slane %v412, 4
    %v414 = vadd.f32 %v412, %v413
    %v415 = vrot.slane %v414, 2
    %v416 = vadd.f32 %v414, %v415
    %v417 = vrot.slane %v416, 1
    %v418 = vadd.f32 %v416, %v417
    %419 = vmatpush.msra.mxu0 %v411
    %420 = vmatpush.msra.mxu0 %v410
    %421 = vmatpush.msra.mxu0 %v409
    %422 = vmatpush.msra.mxu0 %v408
    %423 = vmatpush.msra.mxu0 %v407
    %424 = vmatpush.msra.mxu0 %v406
    %425 = vmatpush.msra.mxu0 %v405
    %426 = vmatpush.msra.mxu0 %v404
    %427 = vmatpush.msra.mxu0 %v403
    %428 = vmatpush.msra.mxu0 %v402
    %429 = vmatpush.msra.mxu0 %v401
    %430 = vmatpush.msra.mxu0 %v400
    %431 = vmatpush.msra.mxu0 %v399
    %432 = vmatpush.msra.mxu0 %v398
    %433 = vmatpush.msra.mxu0 %v397
    %434 = vmatpush.msra.mxu0 %v396
    %435 = vmatmul.f32.gmra.mxu0 %v418
    %v436 = vpop.f32.mrf.mxu0
    %v437 = vadd.f32 0.0, %v436
    %438 = vdwg.mxu0
    %v439 = vmul.f32 %v394, %v394
    %v440 = vmul.f32 %v395, %v395
    %v441 = vadd.f32 %v439, %v440
    %v442 = vrot.slane %v441, 4
    %v443 = vadd.f32 %v441, %v442
    %v444 = vrot.slane %v443, 2
    %v445 = vadd.f32 %v443, %v444
    %v446 = vrot.slane %v445, 1
    %v447 = vadd.f32 %v445, %v446
    %448 = vmatpush.msra.mxu0 %v411
    %449 = vmatpush.msra.mxu0 %v410
    %450 = vmatpush.msra.mxu0 %v409
    %451 = vmatpush.msra.mxu0 %v408
    %452 = vmatpush.msra.mxu0 %v407
    %453 = vmatpush.msra.mxu0 %v406
    %454 = vmatpush.msra.mxu0 %v405
    %455 = vmatpush.msra.mxu0 %v404
    %456 = vmatpush.msra.mxu0 %v403
    %457 = vmatpush.msra.mxu0 %v402
    %458 = vmatpush.msra.mxu0 %v401
    %459 = vmatpush.msra.mxu0 %v400
    %460 = vmatpush.msra.mxu0 %v399
    %461 = vmatpush.msra.mxu0 %v398
    %462 = vmatpush.msra.mxu0 %v397
    %463 = vmatpush.msra.mxu0 %v396
    %464 = vmatmul.f32.gmra.mxu0 %v447
    %v465 = vpop.f32.mrf.mxu0
    %v466 = vadd.f32 0.0, %v465
    %467 = vdwg.mxu0
    %v468 = vmul.f32 %v437, 0.0078125
    %v469 = vmul.f32 %v466, 0.0078125
    %v470 = vmul.f32 %v468, %v468
    %v471 = vsub.f32 %v469, %v470
    %v472 = vmax.f32 %v471, 0.0
    %v473 = vld [vmem:[%s5] sm:$0x1]
    %v474 = vadd.f32 %v472, 1e-05
    %v475 = vrsqrt.pop %v474
    %v476 = vmul.f32 %v475, %v474
    %v477 = vmul.f32 %v476, %v475
    %v478 = vmul.f32 0.5, %v477
    %v479 = vsub.f32 1.5, %v478
    %v480 = vmul.f32 %v475, %v479
    %vm481 = vweird.f32 %v474
    %vm482 = vweird.f32 %v475
    %vm483 = vmor %vm481, %vm482
    %v484 = vsel %vm483, %v475, %v480
    %v485 = vmul.f32 %v473, %v484
    %v486 = vld [vmem:[%s6] sm:$0x1]
    %v487 = vmul.f32 %v468, %v485
    %v488 = vsub.f32 %v486, %v487
    %v489 = vld [vmem:[%s4] sm:$0xff]
    %v490 = vld [vmem:[%s4 + $0x8] sm:$0xff]
    %vm491 = vcmask 130048
    %v493 = vsel %vm491, %v485, 0
    %495 = vmatpush.msra.mxu0 0.0
    %496 = vmatpush.msra.mxu0 0.0
    %497 = vmatpush.msra.mxu0 0.0
    %498 = vmatpush.msra.mxu0 0.0
    %499 = vmatpush.msra.mxu0 0.0
    %500 = vmatpush.msra.mxu0 0.0
    %501 = vmatpush.msra.mxu0 0.0
    %502 = vmatpush.msra.mxu0 0.0
    %503 = vmatpush.msra.mxu0 0.0
    %504 = vmatpush.msra.mxu0 0.0
    %505 = vmatpush.msra.mxu0 0.0
    %506 = vmatpush.msra.mxu0 0.0
    %507 = vmatpush.msra.mxu0 0.0
    %508 = vmatpush.msra.mxu0 0.0
    %509 = vmatpush.msra.mxu0 %v490
    %510 = vmatpush.msra.mxu0 %v489
    %511 = vmatmul.f32.gmra.mxu0 %v493
    %v512 = vpop.f32.mrf.mxu0
    %v513 = vadd.f32 0.0, %v512
    %514 = vdwg.mxu0
    %v515 = vperm.slane %v513, 0
    %v516 = vmul.f32 %v394, %v515
    %v517 = vmul.f32 %v395, %v515
    %v519 = vsel %vm491, %v488, 0
    %521 = vmatpush.msra.mxu0 0.0
    %522 = vmatpush.msra.mxu0 0.0
    %523 = vmatpush.msra.mxu0 0.0
    %524 = vmatpush.msra.mxu0 0.0
    %525 = vmatpush.msra.mxu0 0.0
    %526 = vmatpush.msra.mxu0 0.0
    %527 = vmatpush.msra.mxu0 0.0
    %528 = vmatpush.msra.mxu0 0.0
    %529 = vmatpush.msra.mxu0 0.0
    %530 = vmatpush.msra.mxu0 0.0
    %531 = vmatpush.msra.mxu0 0.0
    %532 = vmatpush.msra.mxu0 0.0
    %533 = vmatpush.msra.mxu0 0.0
    %534 = vmatpush.msra.mxu0 0.0
    %535 = vmatpush.msra.mxu0 %v490
    %536 = vmatpush.msra.mxu0 %v489
    %537 = vmatmul.f32.gmra.mxu0 %v519
    %v538 = vpop.f32.mrf.mxu0
    %v539 = vadd.f32 0.0, %v538
    %540 = vdwg.mxu0
    %v541 = vperm.slane %v539, 0
    %v542 = vadd.f32 %v516, %v541
    %v543 = vadd.f32 %v517, %v541
    %vm544 = vcmp.ge.f32.partialorder %v542, 0.0
    %vm545 = vcmp.ge.f32.partialorder %v543, 0.0
    %v546 = vmul.f32 %v542, 0.2
    %v547 = vmul.f32 %v543, 0.2
    %v548 = vsel %vm544, %v542, %v546
    %v549 = vsel %vm545, %v543, %v547
    %v550 = vpack.c.bf16 %v549, %v548
    %v551 = vld [vmem:[%s7] sm:$0xf]
    %v553 = vsel %vm491, %v551, 0
    %555 = vmatpush.bf16.msra.mxu0 0
    %556 = vmatpush.bf16.msra.mxu0 0
    %557 = vmatpush.bf16.msra.mxu0 0
    %558 = vmatpush.bf16.msra.mxu0 0
    %559 = vmatpush.bf16.msra.mxu0 0
    %560 = vmatpush.bf16.msra.mxu0 0
    %561 = vmatpush.bf16.msra.mxu0 0
    %562 = vmatpush.bf16.msra.mxu0 %v550
    %563 = vmatmul.bf16.gmra.mxu0 %v553
    %v564 = vpop.f32.mrf.mxu0
    %v565 = vadd.f32 0.0, %v564
    %v566 = vpop.f32.mrf.mxu0
    %567 = vdwg.mxu0
    %v568 = vpack.c.bf16 %v565, %v565
    %v569 = vld [vmem:[%s8] sm:$0xf]
    %v570 = vld [vmem:[%s8 + $0x4] sm:$0xf]
    %v571 = vld [vmem:[%s8 + $0x8] sm:$0xf]
    %v572 = vld [vmem:[%s8 + $0xc] sm:$0xf]
    %v573 = vld [vmem:[%s8 + $0x10] sm:$0xf]
    %v574 = vld [vmem:[%s8 + $0x14] sm:$0xf]
    %v575 = vld [vmem:[%s8 + $0x18] sm:$0xf]
    %v576 = vld [vmem:[%s8 + $0x1c] sm:$0xf]
    %v577 = vld [vmem:[%s8 + $0x20] sm:$0xf]
    %v578 = vld [vmem:[%s8 + $0x24] sm:$0xf]
    %v579 = vld [vmem:[%s8 + $0x28] sm:$0xf]
    %v580 = vld [vmem:[%s8 + $0x2c] sm:$0xf]
    %v581 = vld [vmem:[%s8 + $0x30] sm:$0xf]
    %v582 = vld [vmem:[%s8 + $0x34] sm:$0xf]
    %v583 = vld [vmem:[%s8 + $0x38] sm:$0xf]
    %v584 = vld [vmem:[%s8 + $0x3c] sm:$0xf]
    %s585 = scalar_lea.vmem %s7, 4
    %v586 = vld [vmem:[%s585] sm:$0xf]
    %v588 = vsel %vm491, %v586, 0
    %590 = vmatpush.bf16.msra.mxu0 0
    %591 = vmatpush.bf16.msra.mxu0 0
    %592 = vmatpush.bf16.msra.mxu0 0
    %593 = vmatpush.bf16.msra.mxu0 0
    %594 = vmatpush.bf16.msra.mxu0 0
    %595 = vmatpush.bf16.msra.mxu0 0
    %596 = vmatpush.bf16.msra.mxu0 0
    %597 = vmatpush.bf16.msra.mxu0 %v550
    %598 = vmatmul.bf16.gmra.mxu0 %v588
    %v599 = vpop.f32.mrf.mxu0
    %v600 = vadd.f32 0.0, %v599
    %v601 = vpop.f32.mrf.mxu0
    %602 = vdwg.mxu0
    %v603 = vpack.c.bf16 %v600, %v600
    %s604 = scalar_lea.vmem %s8, 64
    %v605 = vld [vmem:[%s604] sm:$0xf]
    %v606 = vld [vmem:[%s604 + $0x4] sm:$0xf]
    %v607 = vld [vmem:[%s604 + $0x8] sm:$0xf]
    %v608 = vld [vmem:[%s604 + $0xc] sm:$0xf]
    %v609 = vld [vmem:[%s604 + $0x10] sm:$0xf]
    %v610 = vld [vmem:[%s604 + $0x14] sm:$0xf]
    %v611 = vld [vmem:[%s604 + $0x18] sm:$0xf]
    %v612 = vld [vmem:[%s604 + $0x1c] sm:$0xf]
    %v613 = vld [vmem:[%s604 + $0x20] sm:$0xf]
    %v614 = vld [vmem:[%s604 + $0x24] sm:$0xf]
    %v615 = vld [vmem:[%s604 + $0x28] sm:$0xf]
    %v616 = vld [vmem:[%s604 + $0x2c] sm:$0xf]
    %v617 = vld [vmem:[%s604 + $0x30] sm:$0xf]
    %v618 = vld [vmem:[%s604 + $0x34] sm:$0xf]
    %v619 = vld [vmem:[%s604 + $0x38] sm:$0xf]
    %v620 = vld [vmem:[%s604 + $0x3c] sm:$0xf]
    %v637 = vunpack.c.l.b16 %v605
    %v638 = vunpack.c.l.b16 %v606
    %v639 = vunpack.c.l.b16 %v607
    %v640 = vunpack.c.l.b16 %v608
    %v641 = vunpack.c.l.b16 %v609
    %v642 = vunpack.c.l.b16 %v610
    %v643 = vunpack.c.l.b16 %v611
    %v644 = vunpack.c.l.b16 %v612
    %v645 = vunpack.c.l.b16 %v613
    %v646 = vunpack.c.l.b16 %v614
    %v647 = vunpack.c.l.b16 %v615
    %v648 = vunpack.c.l.b16 %v616
    %v649 = vunpack.c.l.b16 %v617
    %v650 = vunpack.c.l.b16 %v618
    %v651 = vunpack.c.l.b16 %v619
    %v652 = vunpack.c.l.b16 %v620
    %v653 = vpack.c.b16 %v638, %v637
    %v654 = vpack.c.b16 %v640, %v639
    %v655 = vpack.c.b16 %v642, %v641
    %v656 = vpack.c.b16 %v644, %v643
    %v657 = vpack.c.b16 %v646, %v645
    %v658 = vpack.c.b16 %v648, %v647
    %v659 = vpack.c.b16 %v650, %v649
    %v660 = vpack.c.b16 %v652, %v651
    %669 = vmatpush.bf16.msra.mxu0 %v660
    %670 = vmatpush.bf16.msra.mxu0 %v659
    %671 = vmatpush.bf16.msra.mxu0 %v658
    %672 = vmatpush.bf16.msra.mxu0 %v657
    %673 = vmatpush.bf16.msra.mxu0 %v656
    %674 = vmatpush.bf16.msra.mxu0 %v655
    %675 = vmatpush.bf16.msra.mxu0 %v654
    %676 = vmatpush.bf16.msra.mxu0 %v653
    %677 = vmatmul.bf16.gmra.mxu0 %v603
    %v678 = vpop.f32.mrf.mxu0
    %v679 = vadd.f32 0.0, %v678
    %v680 = vpop.f32.mrf.mxu0
    %681 = vdwg.mxu0
    %v698 = vunpack.c.l.b16 %v569
    %v699 = vunpack.c.l.b16 %v570
    %v700 = vunpack.c.l.b16 %v571
    %v701 = vunpack.c.l.b16 %v572
    %v702 = vunpack.c.l.b16 %v573
    %v703 = vunpack.c.l.b16 %v574
    %v704 = vunpack.c.l.b16 %v575
    %v705 = vunpack.c.l.b16 %v576
    %v706 = vunpack.c.l.b16 %v577
    %v707 = vunpack.c.l.b16 %v578
    %v708 = vunpack.c.l.b16 %v579
    %v709 = vunpack.c.l.b16 %v580
    %v710 = vunpack.c.l.b16 %v581
    %v711 = vunpack.c.l.b16 %v582
    %v712 = vunpack.c.l.b16 %v583
    %v713 = vunpack.c.l.b16 %v584
    %v714 = vpack.c.b16 %v699, %v698
    %v715 = vpack.c.b16 %v701, %v700
    %v716 = vpack.c.b16 %v703, %v702
    %v717 = vpack.c.b16 %v705, %v704
    %v718 = vpack.c.b16 %v707, %v706
    %v719 = vpack.c.b16 %v709, %v708
    %v720 = vpack.c.b16 %v711, %v710
    %v721 = vpack.c.b16 %v713, %v712
    %730 = vmatpush.bf16.msra.mxu0 %v721
    %731 = vmatpush.bf16.msra.mxu0 %v720
    %732 = vmatpush.bf16.msra.mxu0 %v719
    %733 = vmatpush.bf16.msra.mxu0 %v718
    %734 = vmatpush.bf16.msra.mxu0 %v717
    %735 = vmatpush.bf16.msra.mxu0 %v716
    %736 = vmatpush.bf16.msra.mxu0 %v715
    %737 = vmatpush.bf16.msra.mxu0 %v714
    %738 = vmatmul.bf16.gmra.mxu0 %v568
    %v739 = vpop.f32.mrf.mxu0
    %v740 = vadd.f32 %v679, %v739
    %v741 = vpop.f32.mrf.mxu0
    %742 = vdwg.mxu0
    %s743 = scalar_lea.vmem %s7, 8
    %v744 = vld [vmem:[%s743] sm:$0xf]
    %v746 = vsel %vm491, %v744, 0
    %748 = vmatpush.bf16.msra.mxu0 0
    %749 = vmatpush.bf16.msra.mxu0 0
    %750 = vmatpush.bf16.msra.mxu0 0
    %751 = vmatpush.bf16.msra.mxu0 0
    %752 = vmatpush.bf16.msra.mxu0 0
    %753 = vmatpush.bf16.msra.mxu0 0
    %754 = vmatpush.bf16.msra.mxu0 0
    %755 = vmatpush.bf16.msra.mxu0 %v550
    %756 = vmatmul.bf16.gmra.mxu0 %v746
    %v757 = vpop.f32.mrf.mxu0
    %v758 = vadd.f32 0.0, %v757
    %v759 = vpop.f32.mrf.mxu0
    %760 = vdwg.mxu0
    %v761 = vpack.c.bf16 %v758, %v758
    %s762 = scalar_lea.vmem %s8, 128
    %v763 = vld [vmem:[%s762] sm:$0xf]
    %v764 = vld [vmem:[%s762 + $0x4] sm:$0xf]
    %v765 = vld [vmem:[%s762 + $0x8] sm:$0xf]
    %v766 = vld [vmem:[%s762 + $0xc] sm:$0xf]
    %v767 = vld [vmem:[%s762 + $0x10] sm:$0xf]
    %v768 = vld [vmem:[%s762 + $0x14] sm:$0xf]
    %v769 = vld [vmem:[%s762 + $0x18] sm:$0xf]
    %v770 = vld [vmem:[%s762 + $0x1c] sm:$0xf]
    %v771 = vld [vmem:[%s762 + $0x20] sm:$0xf]
    %v772 = vld [vmem:[%s762 + $0x24] sm:$0xf]
    %v773 = vld [vmem:[%s762 + $0x28] sm:$0xf]
    %v774 = vld [vmem:[%s762 + $0x2c] sm:$0xf]
    %v775 = vld [vmem:[%s762 + $0x30] sm:$0xf]
    %v776 = vld [vmem:[%s762 + $0x34] sm:$0xf]
    %v777 = vld [vmem:[%s762 + $0x38] sm:$0xf]
    %v778 = vld [vmem:[%s762 + $0x3c] sm:$0xf]
    %v795 = vunpack.c.l.b16 %v763
    %v796 = vunpack.c.l.b16 %v764
    %v797 = vunpack.c.l.b16 %v765
    %v798 = vunpack.c.l.b16 %v766
    %v799 = vunpack.c.l.b16 %v767
    %v800 = vunpack.c.l.b16 %v768
    %v801 = vunpack.c.l.b16 %v769
    %v802 = vunpack.c.l.b16 %v770
    %v803 = vunpack.c.l.b16 %v771
    %v804 = vunpack.c.l.b16 %v772
    %v805 = vunpack.c.l.b16 %v773
    %v806 = vunpack.c.l.b16 %v774
    %v807 = vunpack.c.l.b16 %v775
    %v808 = vunpack.c.l.b16 %v776
    %v809 = vunpack.c.l.b16 %v777
    %v810 = vunpack.c.l.b16 %v778
    %v811 = vpack.c.b16 %v796, %v795
    %v812 = vpack.c.b16 %v798, %v797
    %v813 = vpack.c.b16 %v800, %v799
    %v814 = vpack.c.b16 %v802, %v801
    %v815 = vpack.c.b16 %v804, %v803
    %v816 = vpack.c.b16 %v806, %v805
    %v817 = vpack.c.b16 %v808, %v807
    %v818 = vpack.c.b16 %v810, %v809
    %827 = vmatpush.bf16.msra.mxu0 %v818
    %828 = vmatpush.bf16.msra.mxu0 %v817
    %829 = vmatpush.bf16.msra.mxu0 %v816
    %830 = vmatpush.bf16.msra.mxu0 %v815
    %831 = vmatpush.bf16.msra.mxu0 %v814
    %832 = vmatpush.bf16.msra.mxu0 %v813
    %833 = vmatpush.bf16.msra.mxu0 %v812
    %834 = vmatpush.bf16.msra.mxu0 %v811
    %835 = vmatmul.bf16.gmra.mxu0 %v761
    %v836 = vpop.f32.mrf.mxu0
    %v837 = vadd.f32 0.0, %v836
    %v838 = vpop.f32.mrf.mxu0
    %839 = vdwg.mxu0
    %v840 = vadd.f32 %v740, %v837
    %s841 = scalar_lea.vmem %s7, 12
    %v842 = vld [vmem:[%s841] sm:$0xf]
    %v844 = vsel %vm491, %v842, 0
    %846 = vmatpush.bf16.msra.mxu0 0
    %847 = vmatpush.bf16.msra.mxu0 0
    %848 = vmatpush.bf16.msra.mxu0 0
    %849 = vmatpush.bf16.msra.mxu0 0
    %850 = vmatpush.bf16.msra.mxu0 0
    %851 = vmatpush.bf16.msra.mxu0 0
    %852 = vmatpush.bf16.msra.mxu0 0
    %853 = vmatpush.bf16.msra.mxu0 %v550
    %854 = vmatmul.bf16.gmra.mxu0 %v844
    %v855 = vpop.f32.mrf.mxu0
    %v856 = vadd.f32 0.0, %v855
    %v857 = vpop.f32.mrf.mxu0
    %858 = vdwg.mxu0
    %v859 = vpack.c.bf16 %v856, %v856
    %s860 = scalar_lea.vmem %s8, 192
    %v861 = vld [vmem:[%s860] sm:$0xf]
    %v862 = vld [vmem:[%s860 + $0x4] sm:$0xf]
    %v863 = vld [vmem:[%s860 + $0x8] sm:$0xf]
    %v864 = vld [vmem:[%s860 + $0xc] sm:$0xf]
    %v865 = vld [vmem:[%s860 + $0x10] sm:$0xf]
    %v866 = vld [vmem:[%s860 + $0x14] sm:$0xf]
    %v867 = vld [vmem:[%s860 + $0x18] sm:$0xf]
    %v868 = vld [vmem:[%s860 + $0x1c] sm:$0xf]
    %v869 = vld [vmem:[%s860 + $0x20] sm:$0xf]
    %v870 = vld [vmem:[%s860 + $0x24] sm:$0xf]
    %v871 = vld [vmem:[%s860 + $0x28] sm:$0xf]
    %v872 = vld [vmem:[%s860 + $0x2c] sm:$0xf]
    %v873 = vld [vmem:[%s860 + $0x30] sm:$0xf]
    %v874 = vld [vmem:[%s860 + $0x34] sm:$0xf]
    %v875 = vld [vmem:[%s860 + $0x38] sm:$0xf]
    %v876 = vld [vmem:[%s860 + $0x3c] sm:$0xf]
    %v893 = vunpack.c.l.b16 %v861
    %v894 = vunpack.c.l.b16 %v862
    %v895 = vunpack.c.l.b16 %v863
    %v896 = vunpack.c.l.b16 %v864
    %v897 = vunpack.c.l.b16 %v865
    %v898 = vunpack.c.l.b16 %v866
    %v899 = vunpack.c.l.b16 %v867
    %v900 = vunpack.c.l.b16 %v868
    %v901 = vunpack.c.l.b16 %v869
    %v902 = vunpack.c.l.b16 %v870
    %v903 = vunpack.c.l.b16 %v871
    %v904 = vunpack.c.l.b16 %v872
    %v905 = vunpack.c.l.b16 %v873
    %v906 = vunpack.c.l.b16 %v874
    %v907 = vunpack.c.l.b16 %v875
    %v908 = vunpack.c.l.b16 %v876
    %v909 = vpack.c.b16 %v894, %v893
    %v910 = vpack.c.b16 %v896, %v895
    %v911 = vpack.c.b16 %v898, %v897
    %v912 = vpack.c.b16 %v900, %v899
    %v913 = vpack.c.b16 %v902, %v901
    %v914 = vpack.c.b16 %v904, %v903
    %v915 = vpack.c.b16 %v906, %v905
    %v916 = vpack.c.b16 %v908, %v907
    %925 = vmatpush.bf16.msra.mxu0 %v916
    %926 = vmatpush.bf16.msra.mxu0 %v915
    %927 = vmatpush.bf16.msra.mxu0 %v914
    %928 = vmatpush.bf16.msra.mxu0 %v913
    %929 = vmatpush.bf16.msra.mxu0 %v912
    %930 = vmatpush.bf16.msra.mxu0 %v911
    %931 = vmatpush.bf16.msra.mxu0 %v910
    %932 = vmatpush.bf16.msra.mxu0 %v909
    %933 = vmatmul.bf16.gmra.mxu0 %v859
    %v934 = vpop.f32.mrf.mxu0
    %v935 = vadd.f32 0.0, %v934
    %v936 = vpop.f32.mrf.mxu0
    %937 = vdwg.mxu0
    %v938 = vadd.f32 %v840, %v935
    %v939 = vld [vmem:[%s9] sm:$0xff]
    %v940 = vld [vmem:[%s9 + $0x8] sm:$0xff]
    %v941 = vld [vmem:[%s9 + $0x10] sm:$0xff]
    %v942 = vld [vmem:[%s9 + $0x18] sm:$0xff]
    %v943 = vld [vmem:[%s9 + $0x20] sm:$0xff]
    %v944 = vld [vmem:[%s9 + $0x28] sm:$0xff]
    %v945 = vld [vmem:[%s9 + $0x30] sm:$0xff]
    %v946 = vld [vmem:[%s9 + $0x38] sm:$0xff]
    %v947 = vld [vmem:[%s9 + $0x40] sm:$0xff]
    %v948 = vld [vmem:[%s9 + $0x48] sm:$0xff]
    %v949 = vld [vmem:[%s9 + $0x50] sm:$0xff]
    %v950 = vld [vmem:[%s9 + $0x58] sm:$0xff]
    %v951 = vld [vmem:[%s9 + $0x60] sm:$0xff]
    %v952 = vld [vmem:[%s9 + $0x68] sm:$0xff]
    %v953 = vld [vmem:[%s9 + $0x70] sm:$0xff]
    %v954 = vld [vmem:[%s9 + $0x78] sm:$0xff]
    %v955 = vrot.slane %v938, 4
    %v956 = vadd.f32 %v938, %v955
    %v957 = vrot.slane %v956, 2
    %v958 = vadd.f32 %v956, %v957
    %v959 = vrot.slane %v958, 1
    %v960 = vadd.f32 %v958, %v959
    %961 = vmatpush.msra.mxu0 %v954
    %962 = vmatpush.msra.mxu0 %v953
    %963 = vmatpush.msra.mxu0 %v952
    %964 = vmatpush.msra.mxu0 %v951
    %965 = vmatpush.msra.mxu0 %v950
    %966 = vmatpush.msra.mxu0 %v949
    %967 = vmatpush.msra.mxu0 %v948
    %968 = vmatpush.msra.mxu0 %v947
    %969 = vmatpush.msra.mxu0 %v946
    %970 = vmatpush.msra.mxu0 %v945
    %971 = vmatpush.msra.mxu0 %v944
    %972 = vmatpush.msra.mxu0 %v943
    %973 = vmatpush.msra.mxu0 %v942
    %974 = vmatpush.msra.mxu0 %v941
    %975 = vmatpush.msra.mxu0 %v940
    %976 = vmatpush.msra.mxu0 %v939
    %977 = vmatmul.f32.gmra.mxu0 %v960
    %v978 = vpop.f32.mrf.mxu0
    %v979 = vadd.f32 0.0, %v978
    %980 = vdwg.mxu0
    %v981 = vmul.f32 %v938, %v938
    %v982 = vrot.slane %v981, 4
    %v983 = vadd.f32 %v981, %v982
    %v984 = vrot.slane %v983, 2
    %v985 = vadd.f32 %v983, %v984
    %v986 = vrot.slane %v985, 1
    %v987 = vadd.f32 %v985, %v986
    %988 = vmatpush.msra.mxu0 %v954
    %989 = vmatpush.msra.mxu0 %v953
    %990 = vmatpush.msra.mxu0 %v952
    %991 = vmatpush.msra.mxu0 %v951
    %992 = vmatpush.msra.mxu0 %v950
    %993 = vmatpush.msra.mxu0 %v949
    %994 = vmatpush.msra.mxu0 %v948
    %995 = vmatpush.msra.mxu0 %v947
    %996 = vmatpush.msra.mxu0 %v946
    %997 = vmatpush.msra.mxu0 %v945
    %998 = vmatpush.msra.mxu0 %v944
    %999 = vmatpush.msra.mxu0 %v943
    %1000 = vmatpush.msra.mxu0 %v942
    %1001 = vmatpush.msra.mxu0 %v941
    %1002 = vmatpush.msra.mxu0 %v940
    %1003 = vmatpush.msra.mxu0 %v939
    %1004 = vmatmul.f32.gmra.mxu0 %v987
    %v1005 = vpop.f32.mrf.mxu0
    %v1006 = vadd.f32 0.0, %v1005
    %1007 = vdwg.mxu0
    %v1008 = vmul.f32 %v979, 0.03125
    %v1009 = vmul.f32 %v1006, 0.03125
    %v1010 = vmul.f32 %v1008, %v1008
    %v1011 = vsub.f32 %v1009, %v1010
    %v1012 = vmax.f32 %v1011, 0.0
    %v1013 = vld [vmem:[%s11] sm:$0x1]
    %v1014 = vadd.f32 %v1012, 1e-05
    %v1015 = vrsqrt.pop %v1014
    %v1016 = vmul.f32 %v1015, %v1014
    %v1017 = vmul.f32 %v1016, %v1015
    %v1018 = vmul.f32 0.5, %v1017
    %v1019 = vsub.f32 1.5, %v1018
    %v1020 = vmul.f32 %v1015, %v1019
    %vm1021 = vweird.f32 %v1014
    %vm1022 = vweird.f32 %v1015
    %vm1023 = vmor %vm1021, %vm1022
    %v1024 = vsel %vm1023, %v1015, %v1020
    %v1025 = vmul.f32 %v1013, %v1024
    %v1026 = vld [vmem:[%s12] sm:$0x1]
    %v1027 = vmul.f32 %v1008, %v1025
    %v1028 = vsub.f32 %v1026, %v1027
    %v1029 = vld [vmem:[%s10] sm:$0xff]
    %v1030 = vld [vmem:[%s10 + $0x8] sm:$0xff]
    %v1031 = vld [vmem:[%s10 + $0x10] sm:$0xff]
    %v1032 = vld [vmem:[%s10 + $0x18] sm:$0xff]
    %v1034 = vsel %vm95, %v1025, 0
    %1036 = vmatpush.msra.mxu0 0.0
    %1037 = vmatpush.msra.mxu0 0.0
    %1038 = vmatpush.msra.mxu0 0.0
    %1039 = vmatpush.msra.mxu0 0.0
    %1040 = vmatpush.msra.mxu0 0.0
    %1041 = vmatpush.msra.mxu0 0.0
    %1042 = vmatpush.msra.mxu0 0.0
    %1043 = vmatpush.msra.mxu0 0.0
    %1044 = vmatpush.msra.mxu0 0.0
    %1045 = vmatpush.msra.mxu0 0.0
    %1046 = vmatpush.msra.mxu0 0.0
    %1047 = vmatpush.msra.mxu0 0.0
    %1048 = vmatpush.msra.mxu0 %v1032
    %1049 = vmatpush.msra.mxu0 %v1031
    %1050 = vmatpush.msra.mxu0 %v1030
    %1051 = vmatpush.msra.mxu0 %v1029
    %1052 = vmatmul.f32.gmra.mxu0 %v1034
    %v1053 = vpop.f32.mrf.mxu0
    %v1054 = vadd.f32 0.0, %v1053
    %1055 = vdwg.mxu0
    %v1056 = vperm.slane %v1054, 0
    %v1057 = vmul.f32 %v938, %v1056
    %v1059 = vsel %vm95, %v1028, 0
    %1061 = vmatpush.msra.mxu0 0.0
    %1062 = vmatpush.msra.mxu0 0.0
    %1063 = vmatpush.msra.mxu0 0.0
    %1064 = vmatpush.msra.mxu0 0.0
    %1065 = vmatpush.msra.mxu0 0.0
    %1066 = vmatpush.msra.mxu0 0.0
    %1067 = vmatpush.msra.mxu0 0.0
    %1068 = vmatpush.msra.mxu0 0.0
    %1069 = vmatpush.msra.mxu0 0.0
    %1070 = vmatpush.msra.mxu0 0.0
    %1071 = vmatpush.msra.mxu0 0.0
    %1072 = vmatpush.msra.mxu0 0.0
    %1073 = vmatpush.msra.mxu0 %v1032
    %1074 = vmatpush.msra.mxu0 %v1031
    %1075 = vmatpush.msra.mxu0 %v1030
    %1076 = vmatpush.msra.mxu0 %v1029
    %1077 = vmatmul.f32.gmra.mxu0 %v1059
    %v1078 = vpop.f32.mrf.mxu0
    %v1079 = vadd.f32 0.0, %v1078
    %1080 = vdwg.mxu0
    %v1081 = vperm.slane %v1079, 0
    %v1082 = vadd.f32 %v1057, %v1081
    %vm1083 = vcmp.ge.f32.partialorder %v1082, 0.0
    %v1084 = vmul.f32 %v1082, 0.2
    %v1085 = vsel %vm1083, %v1082, %v1084
    %v1086 = vpack.c.bf16 %v1085, %v1085
    %v1087 = vld [vmem:[%s13] sm:$0x3]
    %vm1088 = vcmask 64512
    %v1090 = vsel %vm1088, %v1087, 0
    %vm1092 = vcmask 1043456
    %v1094 = vsel %vm1092, %v1086, 0
    %1096 = vmatpush.bf16.msra.mxu0 0
    %1097 = vmatpush.bf16.msra.mxu0 0
    %1098 = vmatpush.bf16.msra.mxu0 0
    %1099 = vmatpush.bf16.msra.mxu0 0
    %1100 = vmatpush.bf16.msra.mxu0 0
    %1101 = vmatpush.bf16.msra.mxu0 0
    %1102 = vmatpush.bf16.msra.mxu0 0
    %1103 = vmatpush.bf16.msra.mxu0 %v1094
    %1104 = vmatmul.bf16.gmra.mxu0 %v1090
    %v1105 = vpop.f32.mrf.mxu0
    %v1106 = vadd.f32 0.0, %v1105
    %v1107 = vpop.f32.mrf.mxu0
    %1108 = vdwg.mxu0
    %v1109 = vpack.c.bf16 %v1106, %v1106
    %v1110 = vld [vmem:[%s14] sm:$0xf]
    %v1111 = vld [vmem:[%s14 + $0x4] sm:$0xf]
    %v1112 = vld [vmem:[%s14 + $0x8] sm:$0xf]
    %v1113 = vld [vmem:[%s14 + $0xc] sm:$0xf]
    %v1114 = vld [vmem:[%s14 + $0x10] sm:$0xf]
    %v1115 = vld [vmem:[%s14 + $0x14] sm:$0xf]
    %v1116 = vld [vmem:[%s14 + $0x18] sm:$0xf]
    %v1117 = vld [vmem:[%s14 + $0x1c] sm:$0xf]
    %v1118 = vld [vmem:[%s14 + $0x20] sm:$0xf]
    %v1119 = vld [vmem:[%s14 + $0x24] sm:$0xf]
    %v1120 = vld [vmem:[%s14 + $0x28] sm:$0xf]
    %v1121 = vld [vmem:[%s14 + $0x2c] sm:$0xf]
    %v1122 = vld [vmem:[%s14 + $0x30] sm:$0xf]
    %v1123 = vld [vmem:[%s14 + $0x34] sm:$0xf]
    %v1124 = vld [vmem:[%s14 + $0x38] sm:$0xf]
    %v1125 = vld [vmem:[%s14 + $0x3c] sm:$0xf]
    %s1126 = scalar_lea.vmem %s13, 2
    %v1127 = vld [vmem:[%s1126] sm:$0x3]
    %v1129 = vsel %vm1088, %v1127, 0
    %1131 = vmatpush.bf16.msra.mxu0 0
    %1132 = vmatpush.bf16.msra.mxu0 0
    %1133 = vmatpush.bf16.msra.mxu0 0
    %1134 = vmatpush.bf16.msra.mxu0 0
    %1135 = vmatpush.bf16.msra.mxu0 0
    %1136 = vmatpush.bf16.msra.mxu0 0
    %1137 = vmatpush.bf16.msra.mxu0 0
    %1138 = vmatpush.bf16.msra.mxu0 %v1094
    %1139 = vmatmul.bf16.gmra.mxu0 %v1129
    %v1140 = vpop.f32.mrf.mxu0
    %v1141 = vadd.f32 0.0, %v1140
    %v1142 = vpop.f32.mrf.mxu0
    %1143 = vdwg.mxu0
    %v1144 = vpack.c.bf16 %v1141, %v1141
    %s1145 = scalar_lea.vmem %s14, 64
    %v1146 = vld [vmem:[%s1145] sm:$0xf]
    %v1147 = vld [vmem:[%s1145 + $0x4] sm:$0xf]
    %v1148 = vld [vmem:[%s1145 + $0x8] sm:$0xf]
    %v1149 = vld [vmem:[%s1145 + $0xc] sm:$0xf]
    %v1150 = vld [vmem:[%s1145 + $0x10] sm:$0xf]
    %v1151 = vld [vmem:[%s1145 + $0x14] sm:$0xf]
    %v1152 = vld [vmem:[%s1145 + $0x18] sm:$0xf]
    %v1153 = vld [vmem:[%s1145 + $0x1c] sm:$0xf]
    %v1154 = vld [vmem:[%s1145 + $0x20] sm:$0xf]
    %v1155 = vld [vmem:[%s1145 + $0x24] sm:$0xf]
    %v1156 = vld [vmem:[%s1145 + $0x28] sm:$0xf]
    %v1157 = vld [vmem:[%s1145 + $0x2c] sm:$0xf]
    %v1158 = vld [vmem:[%s1145 + $0x30] sm:$0xf]
    %v1159 = vld [vmem:[%s1145 + $0x34] sm:$0xf]
    %v1160 = vld [vmem:[%s1145 + $0x38] sm:$0xf]
    %v1161 = vld [vmem:[%s1145 + $0x3c] sm:$0xf]
    %v1178 = vunpack.c.l.b16 %v1146
    %v1179 = vunpack.c.l.b16 %v1147
    %v1180 = vunpack.c.l.b16 %v1148
    %v1181 = vunpack.c.l.b16 %v1149
    %v1182 = vunpack.c.l.b16 %v1150
    %v1183 = vunpack.c.l.b16 %v1151
    %v1184 = vunpack.c.l.b16 %v1152
    %v1185 = vunpack.c.l.b16 %v1153
    %v1186 = vunpack.c.l.b16 %v1154
    %v1187 = vunpack.c.l.b16 %v1155
    %v1188 = vunpack.c.l.b16 %v1156
    %v1189 = vunpack.c.l.b16 %v1157
    %v1190 = vunpack.c.l.b16 %v1158
    %v1191 = vunpack.c.l.b16 %v1159
    %v1192 = vunpack.c.l.b16 %v1160
    %v1193 = vunpack.c.l.b16 %v1161
    %v1194 = vpack.c.b16 %v1179, %v1178
    %v1195 = vpack.c.b16 %v1181, %v1180
    %v1196 = vpack.c.b16 %v1183, %v1182
    %v1197 = vpack.c.b16 %v1185, %v1184
    %v1198 = vpack.c.b16 %v1187, %v1186
    %v1199 = vpack.c.b16 %v1189, %v1188
    %v1200 = vpack.c.b16 %v1191, %v1190
    %v1201 = vpack.c.b16 %v1193, %v1192
    %1210 = vmatpush.bf16.msra.mxu0 %v1201
    %1211 = vmatpush.bf16.msra.mxu0 %v1200
    %1212 = vmatpush.bf16.msra.mxu0 %v1199
    %1213 = vmatpush.bf16.msra.mxu0 %v1198
    %1214 = vmatpush.bf16.msra.mxu0 %v1197
    %1215 = vmatpush.bf16.msra.mxu0 %v1196
    %1216 = vmatpush.bf16.msra.mxu0 %v1195
    %1217 = vmatpush.bf16.msra.mxu0 %v1194
    %1218 = vmatmul.bf16.gmra.mxu0 %v1144
    %v1219 = vpop.f32.mrf.mxu0
    %v1220 = vadd.f32 0.0, %v1219
    %v1221 = vpop.f32.mrf.mxu0
    %1222 = vdwg.mxu0
    %v1239 = vunpack.c.l.b16 %v1110
    %v1240 = vunpack.c.l.b16 %v1111
    %v1241 = vunpack.c.l.b16 %v1112
    %v1242 = vunpack.c.l.b16 %v1113
    %v1243 = vunpack.c.l.b16 %v1114
    %v1244 = vunpack.c.l.b16 %v1115
    %v1245 = vunpack.c.l.b16 %v1116
    %v1246 = vunpack.c.l.b16 %v1117
    %v1247 = vunpack.c.l.b16 %v1118
    %v1248 = vunpack.c.l.b16 %v1119
    %v1249 = vunpack.c.l.b16 %v1120
    %v1250 = vunpack.c.l.b16 %v1121
    %v1251 = vunpack.c.l.b16 %v1122
    %v1252 = vunpack.c.l.b16 %v1123
    %v1253 = vunpack.c.l.b16 %v1124
    %v1254 = vunpack.c.l.b16 %v1125
    %v1255 = vpack.c.b16 %v1240, %v1239
    %v1256 = vpack.c.b16 %v1242, %v1241
    %v1257 = vpack.c.b16 %v1244, %v1243
    %v1258 = vpack.c.b16 %v1246, %v1245
    %v1259 = vpack.c.b16 %v1248, %v1247
    %v1260 = vpack.c.b16 %v1250, %v1249
    %v1261 = vpack.c.b16 %v1252, %v1251
    %v1262 = vpack.c.b16 %v1254, %v1253
    %1271 = vmatpush.bf16.msra.mxu0 %v1262
    %1272 = vmatpush.bf16.msra.mxu0 %v1261
    %1273 = vmatpush.bf16.msra.mxu0 %v1260
    %1274 = vmatpush.bf16.msra.mxu0 %v1259
    %1275 = vmatpush.bf16.msra.mxu0 %v1258
    %1276 = vmatpush.bf16.msra.mxu0 %v1257
    %1277 = vmatpush.bf16.msra.mxu0 %v1256
    %1278 = vmatpush.bf16.msra.mxu0 %v1255
    %1279 = vmatmul.bf16.gmra.mxu0 %v1109
    %v1280 = vpop.f32.mrf.mxu0
    %v1281 = vadd.f32 %v1220, %v1280
    %v1282 = vpop.f32.mrf.mxu0
    %1283 = vdwg.mxu0
    %s1284 = scalar_lea.vmem %s13, 4
    %v1285 = vld [vmem:[%s1284] sm:$0x3]
    %v1287 = vsel %vm1088, %v1285, 0
    %1289 = vmatpush.bf16.msra.mxu0 0
    %1290 = vmatpush.bf16.msra.mxu0 0
    %1291 = vmatpush.bf16.msra.mxu0 0
    %1292 = vmatpush.bf16.msra.mxu0 0
    %1293 = vmatpush.bf16.msra.mxu0 0
    %1294 = vmatpush.bf16.msra.mxu0 0
    %1295 = vmatpush.bf16.msra.mxu0 0
    %1296 = vmatpush.bf16.msra.mxu0 %v1094
    %1297 = vmatmul.bf16.gmra.mxu0 %v1287
    %v1298 = vpop.f32.mrf.mxu0
    %v1299 = vadd.f32 0.0, %v1298
    %v1300 = vpop.f32.mrf.mxu0
    %1301 = vdwg.mxu0
    %v1302 = vpack.c.bf16 %v1299, %v1299
    %s1303 = scalar_lea.vmem %s14, 128
    %v1304 = vld [vmem:[%s1303] sm:$0xf]
    %v1305 = vld [vmem:[%s1303 + $0x4] sm:$0xf]
    %v1306 = vld [vmem:[%s1303 + $0x8] sm:$0xf]
    %v1307 = vld [vmem:[%s1303 + $0xc] sm:$0xf]
    %v1308 = vld [vmem:[%s1303 + $0x10] sm:$0xf]
    %v1309 = vld [vmem:[%s1303 + $0x14] sm:$0xf]
    %v1310 = vld [vmem:[%s1303 + $0x18] sm:$0xf]
    %v1311 = vld [vmem:[%s1303 + $0x1c] sm:$0xf]
    %v1312 = vld [vmem:[%s1303 + $0x20] sm:$0xf]
    %v1313 = vld [vmem:[%s1303 + $0x24] sm:$0xf]
    %v1314 = vld [vmem:[%s1303 + $0x28] sm:$0xf]
    %v1315 = vld [vmem:[%s1303 + $0x2c] sm:$0xf]
    %v1316 = vld [vmem:[%s1303 + $0x30] sm:$0xf]
    %v1317 = vld [vmem:[%s1303 + $0x34] sm:$0xf]
    %v1318 = vld [vmem:[%s1303 + $0x38] sm:$0xf]
    %v1319 = vld [vmem:[%s1303 + $0x3c] sm:$0xf]
    %v1336 = vunpack.c.l.b16 %v1304
    %v1337 = vunpack.c.l.b16 %v1305
    %v1338 = vunpack.c.l.b16 %v1306
    %v1339 = vunpack.c.l.b16 %v1307
    %v1340 = vunpack.c.l.b16 %v1308
    %v1341 = vunpack.c.l.b16 %v1309
    %v1342 = vunpack.c.l.b16 %v1310
    %v1343 = vunpack.c.l.b16 %v1311
    %v1344 = vunpack.c.l.b16 %v1312
    %v1345 = vunpack.c.l.b16 %v1313
    %v1346 = vunpack.c.l.b16 %v1314
    %v1347 = vunpack.c.l.b16 %v1315
    %v1348 = vunpack.c.l.b16 %v1316
    %v1349 = vunpack.c.l.b16 %v1317
    %v1350 = vunpack.c.l.b16 %v1318
    %v1351 = vunpack.c.l.b16 %v1319
    %v1352 = vpack.c.b16 %v1337, %v1336
    %v1353 = vpack.c.b16 %v1339, %v1338
    %v1354 = vpack.c.b16 %v1341, %v1340
    %v1355 = vpack.c.b16 %v1343, %v1342
    %v1356 = vpack.c.b16 %v1345, %v1344
    %v1357 = vpack.c.b16 %v1347, %v1346
    %v1358 = vpack.c.b16 %v1349, %v1348
    %v1359 = vpack.c.b16 %v1351, %v1350
    %1368 = vmatpush.bf16.msra.mxu0 %v1359
    %1369 = vmatpush.bf16.msra.mxu0 %v1358
    %1370 = vmatpush.bf16.msra.mxu0 %v1357
    %1371 = vmatpush.bf16.msra.mxu0 %v1356
    %1372 = vmatpush.bf16.msra.mxu0 %v1355
    %1373 = vmatpush.bf16.msra.mxu0 %v1354
    %1374 = vmatpush.bf16.msra.mxu0 %v1353
    %1375 = vmatpush.bf16.msra.mxu0 %v1352
    %1376 = vmatmul.bf16.gmra.mxu0 %v1302
    %v1377 = vpop.f32.mrf.mxu0
    %v1378 = vadd.f32 0.0, %v1377
    %v1379 = vpop.f32.mrf.mxu0
    %1380 = vdwg.mxu0
    %v1381 = vadd.f32 %v1281, %v1378
    %s1382 = scalar_lea.vmem %s13, 6
    %v1383 = vld [vmem:[%s1382] sm:$0x3]
    %v1385 = vsel %vm1088, %v1383, 0
    %1387 = vmatpush.bf16.msra.mxu0 0
    %1388 = vmatpush.bf16.msra.mxu0 0
    %1389 = vmatpush.bf16.msra.mxu0 0
    %1390 = vmatpush.bf16.msra.mxu0 0
    %1391 = vmatpush.bf16.msra.mxu0 0
    %1392 = vmatpush.bf16.msra.mxu0 0
    %1393 = vmatpush.bf16.msra.mxu0 0
    %1394 = vmatpush.bf16.msra.mxu0 %v1094
    %1395 = vmatmul.bf16.gmra.mxu0 %v1385
    %v1396 = vpop.f32.mrf.mxu0
    %v1397 = vadd.f32 0.0, %v1396
    %v1398 = vpop.f32.mrf.mxu0
    %1399 = vdwg.mxu0
    %v1400 = vpack.c.bf16 %v1397, %v1397
    %s1401 = scalar_lea.vmem %s14, 192
    %v1402 = vld [vmem:[%s1401] sm:$0xf]
    %v1403 = vld [vmem:[%s1401 + $0x4] sm:$0xf]
    %v1404 = vld [vmem:[%s1401 + $0x8] sm:$0xf]
    %v1405 = vld [vmem:[%s1401 + $0xc] sm:$0xf]
    %v1406 = vld [vmem:[%s1401 + $0x10] sm:$0xf]
    %v1407 = vld [vmem:[%s1401 + $0x14] sm:$0xf]
    %v1408 = vld [vmem:[%s1401 + $0x18] sm:$0xf]
    %v1409 = vld [vmem:[%s1401 + $0x1c] sm:$0xf]
    %v1410 = vld [vmem:[%s1401 + $0x20] sm:$0xf]
    %v1411 = vld [vmem:[%s1401 + $0x24] sm:$0xf]
    %v1412 = vld [vmem:[%s1401 + $0x28] sm:$0xf]
    %v1413 = vld [vmem:[%s1401 + $0x2c] sm:$0xf]
    %v1414 = vld [vmem:[%s1401 + $0x30] sm:$0xf]
    %v1415 = vld [vmem:[%s1401 + $0x34] sm:$0xf]
    %v1416 = vld [vmem:[%s1401 + $0x38] sm:$0xf]
    %v1417 = vld [vmem:[%s1401 + $0x3c] sm:$0xf]
    %v1434 = vunpack.c.l.b16 %v1402
    %v1435 = vunpack.c.l.b16 %v1403
    %v1436 = vunpack.c.l.b16 %v1404
    %v1437 = vunpack.c.l.b16 %v1405
    %v1438 = vunpack.c.l.b16 %v1406
    %v1439 = vunpack.c.l.b16 %v1407
    %v1440 = vunpack.c.l.b16 %v1408
    %v1441 = vunpack.c.l.b16 %v1409
    %v1442 = vunpack.c.l.b16 %v1410
    %v1443 = vunpack.c.l.b16 %v1411
    %v1444 = vunpack.c.l.b16 %v1412
    %v1445 = vunpack.c.l.b16 %v1413
    %v1446 = vunpack.c.l.b16 %v1414
    %v1447 = vunpack.c.l.b16 %v1415
    %v1448 = vunpack.c.l.b16 %v1416
    %v1449 = vunpack.c.l.b16 %v1417
    %v1450 = vpack.c.b16 %v1435, %v1434
    %v1451 = vpack.c.b16 %v1437, %v1436
    %v1452 = vpack.c.b16 %v1439, %v1438
    %v1453 = vpack.c.b16 %v1441, %v1440
    %v1454 = vpack.c.b16 %v1443, %v1442
    %v1455 = vpack.c.b16 %v1445, %v1444
    %v1456 = vpack.c.b16 %v1447, %v1446
    %v1457 = vpack.c.b16 %v1449, %v1448
    %1466 = vmatpush.bf16.msra.mxu0 %v1457
    %1467 = vmatpush.bf16.msra.mxu0 %v1456
    %1468 = vmatpush.bf16.msra.mxu0 %v1455
    %1469 = vmatpush.bf16.msra.mxu0 %v1454
    %1470 = vmatpush.bf16.msra.mxu0 %v1453
    %1471 = vmatpush.bf16.msra.mxu0 %v1452
    %1472 = vmatpush.bf16.msra.mxu0 %v1451
    %1473 = vmatpush.bf16.msra.mxu0 %v1450
    %1474 = vmatmul.bf16.gmra.mxu0 %v1400
    %v1475 = vpop.f32.mrf.mxu0
    %v1476 = vadd.f32 0.0, %v1475
    %v1477 = vpop.f32.mrf.mxu0
    %1478 = vdwg.mxu0
    %v1479 = vadd.f32 %v1381, %v1476
    %v1480 = vld [vmem:[%s15] sm:$0xff]
    %v1481 = vld [vmem:[%s15 + $0x8] sm:$0xff]
    %v1482 = vld [vmem:[%s15 + $0x10] sm:$0xff]
    %v1483 = vld [vmem:[%s15 + $0x18] sm:$0xff]
    %v1484 = vld [vmem:[%s15 + $0x20] sm:$0xff]
    %v1485 = vld [vmem:[%s15 + $0x28] sm:$0xff]
    %v1486 = vld [vmem:[%s15 + $0x30] sm:$0xff]
    %v1487 = vld [vmem:[%s15 + $0x38] sm:$0xff]
    %v1488 = vld [vmem:[%s15 + $0x40] sm:$0xff]
    %v1489 = vld [vmem:[%s15 + $0x48] sm:$0xff]
    %v1490 = vld [vmem:[%s15 + $0x50] sm:$0xff]
    %v1491 = vld [vmem:[%s15 + $0x58] sm:$0xff]
    %v1492 = vld [vmem:[%s15 + $0x60] sm:$0xff]
    %v1493 = vld [vmem:[%s15 + $0x68] sm:$0xff]
    %v1494 = vld [vmem:[%s15 + $0x70] sm:$0xff]
    %v1495 = vld [vmem:[%s15 + $0x78] sm:$0xff]
    %v1496 = vsel %vm1092, %v1479, 0.0
    %v1497 = vrot.slane %v1496, 4
    %v1498 = vadd.f32 %v1496, %v1497
    %v1499 = vrot.slane %v1498, 2
    %v1500 = vadd.f32 %v1498, %v1499
    %v1501 = vrot.slane %v1500, 1
    %v1502 = vadd.f32 %v1500, %v1501
    %1503 = vmatpush.msra.mxu0 %v1495
    %1504 = vmatpush.msra.mxu0 %v1494
    %1505 = vmatpush.msra.mxu0 %v1493
    %1506 = vmatpush.msra.mxu0 %v1492
    %1507 = vmatpush.msra.mxu0 %v1491
    %1508 = vmatpush.msra.mxu0 %v1490
    %1509 = vmatpush.msra.mxu0 %v1489
    %1510 = vmatpush.msra.mxu0 %v1488
    %1511 = vmatpush.msra.mxu0 %v1487
    %1512 = vmatpush.msra.mxu0 %v1486
    %1513 = vmatpush.msra.mxu0 %v1485
    %1514 = vmatpush.msra.mxu0 %v1484
    %1515 = vmatpush.msra.mxu0 %v1483
    %1516 = vmatpush.msra.mxu0 %v1482
    %1517 = vmatpush.msra.mxu0 %v1481
    %1518 = vmatpush.msra.mxu0 %v1480
    %1519 = vmatmul.f32.gmra.mxu0 %v1502
    %v1520 = vpop.f32.mrf.mxu0
    %v1521 = vadd.f32 0.0, %v1520
    %1522 = vdwg.mxu0
    %v1523 = vmul.f32 %v1479, %v1479
    %v1524 = vsel %vm1092, %v1523, 0.0
    %v1525 = vrot.slane %v1524, 4
    %v1526 = vadd.f32 %v1524, %v1525
    %v1527 = vrot.slane %v1526, 2
    %v1528 = vadd.f32 %v1526, %v1527
    %v1529 = vrot.slane %v1528, 1
    %v1530 = vadd.f32 %v1528, %v1529
    %1531 = vmatpush.msra.mxu0 %v1495
    %1532 = vmatpush.msra.mxu0 %v1494
    %1533 = vmatpush.msra.mxu0 %v1493
    %1534 = vmatpush.msra.mxu0 %v1492
    %1535 = vmatpush.msra.mxu0 %v1491
    %1536 = vmatpush.msra.mxu0 %v1490
    %1537 = vmatpush.msra.mxu0 %v1489
    %1538 = vmatpush.msra.mxu0 %v1488
    %1539 = vmatpush.msra.mxu0 %v1487
    %1540 = vmatpush.msra.mxu0 %v1486
    %1541 = vmatpush.msra.mxu0 %v1485
    %1542 = vmatpush.msra.mxu0 %v1484
    %1543 = vmatpush.msra.mxu0 %v1483
    %1544 = vmatpush.msra.mxu0 %v1482
    %1545 = vmatpush.msra.mxu0 %v1481
    %1546 = vmatpush.msra.mxu0 %v1480
    %1547 = vmatmul.f32.gmra.mxu0 %v1530
    %v1548 = vpop.f32.mrf.mxu0
    %v1549 = vadd.f32 0.0, %v1548
    %1550 = vdwg.mxu0
    %v1551 = vmul.f32 %v1521, 0.125
    %v1552 = vmul.f32 %v1549, 0.125
    %v1553 = vmul.f32 %v1551, %v1551
    %v1554 = vsub.f32 %v1552, %v1553
    %v1555 = vmax.f32 %v1554, 0.0
    %v1556 = vld [vmem:[%s17] sm:$0x1]
    %v1557 = vadd.f32 %v1555, 1e-05
    %v1558 = vrsqrt.pop %v1557
    %v1559 = vmul.f32 %v1558, %v1557
    %v1560 = vmul.f32 %v1559, %v1558
    %v1561 = vmul.f32 0.5, %v1560
    %v1562 = vsub.f32 1.5, %v1561
    %v1563 = vmul.f32 %v1558, %v1562
    %vm1564 = vweird.f32 %v1557
    %vm1565 = vweird.f32 %v1558
    %vm1566 = vmor %vm1564, %vm1565
    %v1567 = vsel %vm1566, %v1558, %v1563
    %v1568 = vmul.f32 %v1556, %v1567
    %v1569 = vld [vmem:[%s18] sm:$0x1]
    %v1570 = vmul.f32 %v1551, %v1568
    %v1571 = vsub.f32 %v1569, %v1570
    %v1572 = vld [vmem:[%s16] sm:$0xff]
    %v1573 = vld [vmem:[%s16 + $0x8] sm:$0xff]
    %v1574 = vld [vmem:[%s16 + $0x10] sm:$0xff]
    %v1575 = vld [vmem:[%s16 + $0x18] sm:$0xff]
    %v1576 = vld [vmem:[%s16 + $0x20] sm:$0xff]
    %v1577 = vld [vmem:[%s16 + $0x28] sm:$0xff]
    %v1578 = vld [vmem:[%s16 + $0x30] sm:$0xff]
    %v1579 = vld [vmem:[%s16 + $0x38] sm:$0xff]
    %v1581 = vsel %vm181, %v1568, 0
    %1583 = vmatpush.msra.mxu0 0.0
    %1584 = vmatpush.msra.mxu0 0.0
    %1585 = vmatpush.msra.mxu0 0.0
    %1586 = vmatpush.msra.mxu0 0.0
    %1587 = vmatpush.msra.mxu0 0.0
    %1588 = vmatpush.msra.mxu0 0.0
    %1589 = vmatpush.msra.mxu0 0.0
    %1590 = vmatpush.msra.mxu0 0.0
    %1591 = vmatpush.msra.mxu0 %v1579
    %1592 = vmatpush.msra.mxu0 %v1578
    %1593 = vmatpush.msra.mxu0 %v1577
    %1594 = vmatpush.msra.mxu0 %v1576
    %1595 = vmatpush.msra.mxu0 %v1575
    %1596 = vmatpush.msra.mxu0 %v1574
    %1597 = vmatpush.msra.mxu0 %v1573
    %1598 = vmatpush.msra.mxu0 %v1572
    %1599 = vmatmul.f32.gmra.mxu0 %v1581
    %v1600 = vpop.f32.mrf.mxu0
    %v1601 = vadd.f32 0.0, %v1600
    %1602 = vdwg.mxu0
    %v1603 = vperm.slane %v1601, 0
    %v1604 = vmul.f32 %v1479, %v1603
    %v1606 = vsel %vm181, %v1571, 0
    %1608 = vmatpush.msra.mxu0 0.0
    %1609 = vmatpush.msra.mxu0 0.0
    %1610 = vmatpush.msra.mxu0 0.0
    %1611 = vmatpush.msra.mxu0 0.0
    %1612 = vmatpush.msra.mxu0 0.0
    %1613 = vmatpush.msra.mxu0 0.0
    %1614 = vmatpush.msra.mxu0 0.0
    %1615 = vmatpush.msra.mxu0 0.0
    %1616 = vmatpush.msra.mxu0 %v1579
    %1617 = vmatpush.msra.mxu0 %v1578
    %1618 = vmatpush.msra.mxu0 %v1577
    %1619 = vmatpush.msra.mxu0 %v1576
    %1620 = vmatpush.msra.mxu0 %v1575
    %1621 = vmatpush.msra.mxu0 %v1574
    %1622 = vmatpush.msra.mxu0 %v1573
    %1623 = vmatpush.msra.mxu0 %v1572
    %1624 = vmatmul.f32.gmra.mxu0 %v1606
    %v1625 = vpop.f32.mrf.mxu0
    %v1626 = vadd.f32 0.0, %v1625
    %1627 = vdwg.mxu0
    %v1628 = vperm.slane %v1626, 0
    %v1629 = vadd.f32 %v1604, %v1628
    %vm1630 = vcmp.ge.f32.partialorder %v1629, 0.0
    %v1631 = vmul.f32 %v1629, 0.2
    %v1632 = vsel %vm1630, %v1629, %v1631
    %v1633 = vpack.c.bf16 %v1632, %v1632
    %v1634 = vld [vmem:[%s19] sm:$0x1]
    %vm1635 = vcmask 31744
    %v1637 = vsel %vm1635, %v1634, 0
    %vm1639 = vcmask 1041408
    %v1641 = vsel %vm1639, %v1633, 0
    %1643 = vmatpush.bf16.msra.mxu0 0
    %1644 = vmatpush.bf16.msra.mxu0 0
    %1645 = vmatpush.bf16.msra.mxu0 0
    %1646 = vmatpush.bf16.msra.mxu0 0
    %1647 = vmatpush.bf16.msra.mxu0 0
    %1648 = vmatpush.bf16.msra.mxu0 0
    %1649 = vmatpush.bf16.msra.mxu0 0
    %1650 = vmatpush.bf16.msra.mxu0 %v1641
    %1651 = vmatmul.bf16.gmra.mxu0 %v1637
    %v1652 = vpop.f32.mrf.mxu0
    %v1653 = vadd.f32 0.0, %v1652
    %v1654 = vpop.f32.mrf.mxu0
    %1655 = vdwg.mxu0
    %v1656 = vpack.c.bf16 %v1653, %v1653
    %v1657 = vld [vmem:[%s20] sm:$0xf]
    %v1658 = vld [vmem:[%s20 + $0x4] sm:$0xf]
    %v1659 = vld [vmem:[%s20 + $0x8] sm:$0xf]
    %v1660 = vld [vmem:[%s20 + $0xc] sm:$0xf]
    %v1661 = vld [vmem:[%s20 + $0x10] sm:$0xf]
    %v1662 = vld [vmem:[%s20 + $0x14] sm:$0xf]
    %v1663 = vld [vmem:[%s20 + $0x18] sm:$0xf]
    %v1664 = vld [vmem:[%s20 + $0x1c] sm:$0xf]
    %v1665 = vld [vmem:[%s20 + $0x20] sm:$0xf]
    %v1666 = vld [vmem:[%s20 + $0x24] sm:$0xf]
    %v1667 = vld [vmem:[%s20 + $0x28] sm:$0xf]
    %v1668 = vld [vmem:[%s20 + $0x2c] sm:$0xf]
    %v1669 = vld [vmem:[%s20 + $0x30] sm:$0xf]
    %v1670 = vld [vmem:[%s20 + $0x34] sm:$0xf]
    %v1671 = vld [vmem:[%s20 + $0x38] sm:$0xf]
    %v1672 = vld [vmem:[%s20 + $0x3c] sm:$0xf]
    %s1673 = scalar_lea.vmem %s19, 1
    %v1674 = vld [vmem:[%s1673] sm:$0x1]
    %v1676 = vsel %vm1635, %v1674, 0
    %1678 = vmatpush.bf16.msra.mxu0 0
    %1679 = vmatpush.bf16.msra.mxu0 0
    %1680 = vmatpush.bf16.msra.mxu0 0
    %1681 = vmatpush.bf16.msra.mxu0 0
    %1682 = vmatpush.bf16.msra.mxu0 0
    %1683 = vmatpush.bf16.msra.mxu0 0
    %1684 = vmatpush.bf16.msra.mxu0 0
    %1685 = vmatpush.bf16.msra.mxu0 %v1641
    %1686 = vmatmul.bf16.gmra.mxu0 %v1676
    %v1687 = vpop.f32.mrf.mxu0
    %v1688 = vadd.f32 0.0, %v1687
    %v1689 = vpop.f32.mrf.mxu0
    %1690 = vdwg.mxu0
    %v1691 = vpack.c.bf16 %v1688, %v1688
    %s1692 = scalar_lea.vmem %s20, 64
    %v1693 = vld [vmem:[%s1692] sm:$0xf]
    %v1694 = vld [vmem:[%s1692 + $0x4] sm:$0xf]
    %v1695 = vld [vmem:[%s1692 + $0x8] sm:$0xf]
    %v1696 = vld [vmem:[%s1692 + $0xc] sm:$0xf]
    %v1697 = vld [vmem:[%s1692 + $0x10] sm:$0xf]
    %v1698 = vld [vmem:[%s1692 + $0x14] sm:$0xf]
    %v1699 = vld [vmem:[%s1692 + $0x18] sm:$0xf]
    %v1700 = vld [vmem:[%s1692 + $0x1c] sm:$0xf]
    %v1701 = vld [vmem:[%s1692 + $0x20] sm:$0xf]
    %v1702 = vld [vmem:[%s1692 + $0x24] sm:$0xf]
    %v1703 = vld [vmem:[%s1692 + $0x28] sm:$0xf]
    %v1704 = vld [vmem:[%s1692 + $0x2c] sm:$0xf]
    %v1705 = vld [vmem:[%s1692 + $0x30] sm:$0xf]
    %v1706 = vld [vmem:[%s1692 + $0x34] sm:$0xf]
    %v1707 = vld [vmem:[%s1692 + $0x38] sm:$0xf]
    %v1708 = vld [vmem:[%s1692 + $0x3c] sm:$0xf]
    %v1725 = vunpack.c.l.b16 %v1693
    %v1726 = vunpack.c.l.b16 %v1694
    %v1727 = vunpack.c.l.b16 %v1695
    %v1728 = vunpack.c.l.b16 %v1696
    %v1729 = vunpack.c.l.b16 %v1697
    %v1730 = vunpack.c.l.b16 %v1698
    %v1731 = vunpack.c.l.b16 %v1699
    %v1732 = vunpack.c.l.b16 %v1700
    %v1733 = vunpack.c.l.b16 %v1701
    %v1734 = vunpack.c.l.b16 %v1702
    %v1735 = vunpack.c.l.b16 %v1703
    %v1736 = vunpack.c.l.b16 %v1704
    %v1737 = vunpack.c.l.b16 %v1705
    %v1738 = vunpack.c.l.b16 %v1706
    %v1739 = vunpack.c.l.b16 %v1707
    %v1740 = vunpack.c.l.b16 %v1708
    %v1741 = vpack.c.b16 %v1726, %v1725
    %v1742 = vpack.c.b16 %v1728, %v1727
    %v1743 = vpack.c.b16 %v1730, %v1729
    %v1744 = vpack.c.b16 %v1732, %v1731
    %v1745 = vpack.c.b16 %v1734, %v1733
    %v1746 = vpack.c.b16 %v1736, %v1735
    %v1747 = vpack.c.b16 %v1738, %v1737
    %v1748 = vpack.c.b16 %v1740, %v1739
    %1757 = vmatpush.bf16.msra.mxu0 %v1748
    %1758 = vmatpush.bf16.msra.mxu0 %v1747
    %1759 = vmatpush.bf16.msra.mxu0 %v1746
    %1760 = vmatpush.bf16.msra.mxu0 %v1745
    %1761 = vmatpush.bf16.msra.mxu0 %v1744
    %1762 = vmatpush.bf16.msra.mxu0 %v1743
    %1763 = vmatpush.bf16.msra.mxu0 %v1742
    %1764 = vmatpush.bf16.msra.mxu0 %v1741
    %1765 = vmatmul.bf16.gmra.mxu0 %v1691
    %v1766 = vpop.f32.mrf.mxu0
    %v1767 = vadd.f32 0.0, %v1766
    %v1768 = vpop.f32.mrf.mxu0
    %1769 = vdwg.mxu0
    %v1786 = vunpack.c.l.b16 %v1657
    %v1787 = vunpack.c.l.b16 %v1658
    %v1788 = vunpack.c.l.b16 %v1659
    %v1789 = vunpack.c.l.b16 %v1660
    %v1790 = vunpack.c.l.b16 %v1661
    %v1791 = vunpack.c.l.b16 %v1662
    %v1792 = vunpack.c.l.b16 %v1663
    %v1793 = vunpack.c.l.b16 %v1664
    %v1794 = vunpack.c.l.b16 %v1665
    %v1795 = vunpack.c.l.b16 %v1666
    %v1796 = vunpack.c.l.b16 %v1667
    %v1797 = vunpack.c.l.b16 %v1668
    %v1798 = vunpack.c.l.b16 %v1669
    %v1799 = vunpack.c.l.b16 %v1670
    %v1800 = vunpack.c.l.b16 %v1671
    %v1801 = vunpack.c.l.b16 %v1672
    %v1802 = vpack.c.b16 %v1787, %v1786
    %v1803 = vpack.c.b16 %v1789, %v1788
    %v1804 = vpack.c.b16 %v1791, %v1790
    %v1805 = vpack.c.b16 %v1793, %v1792
    %v1806 = vpack.c.b16 %v1795, %v1794
    %v1807 = vpack.c.b16 %v1797, %v1796
    %v1808 = vpack.c.b16 %v1799, %v1798
    %v1809 = vpack.c.b16 %v1801, %v1800
    %1818 = vmatpush.bf16.msra.mxu0 %v1809
    %1819 = vmatpush.bf16.msra.mxu0 %v1808
    %1820 = vmatpush.bf16.msra.mxu0 %v1807
    %1821 = vmatpush.bf16.msra.mxu0 %v1806
    %1822 = vmatpush.bf16.msra.mxu0 %v1805
    %1823 = vmatpush.bf16.msra.mxu0 %v1804
    %1824 = vmatpush.bf16.msra.mxu0 %v1803
    %1825 = vmatpush.bf16.msra.mxu0 %v1802
    %1826 = vmatmul.bf16.gmra.mxu0 %v1656
    %v1827 = vpop.f32.mrf.mxu0
    %v1828 = vadd.f32 %v1767, %v1827
    %v1829 = vpop.f32.mrf.mxu0
    %1830 = vdwg.mxu0
    %s1831 = scalar_lea.vmem %s19, 2
    %v1832 = vld [vmem:[%s1831] sm:$0x1]
    %v1834 = vsel %vm1635, %v1832, 0
    %1836 = vmatpush.bf16.msra.mxu0 0
    %1837 = vmatpush.bf16.msra.mxu0 0
    %1838 = vmatpush.bf16.msra.mxu0 0
    %1839 = vmatpush.bf16.msra.mxu0 0
    %1840 = vmatpush.bf16.msra.mxu0 0
    %1841 = vmatpush.bf16.msra.mxu0 0
    %1842 = vmatpush.bf16.msra.mxu0 0
    %1843 = vmatpush.bf16.msra.mxu0 %v1641
    %1844 = vmatmul.bf16.gmra.mxu0 %v1834
    %v1845 = vpop.f32.mrf.mxu0
    %v1846 = vadd.f32 0.0, %v1845
    %v1847 = vpop.f32.mrf.mxu0
    %1848 = vdwg.mxu0
    %v1849 = vpack.c.bf16 %v1846, %v1846
    %s1850 = scalar_lea.vmem %s20, 128
    %v1851 = vld [vmem:[%s1850] sm:$0xf]
    %v1852 = vld [vmem:[%s1850 + $0x4] sm:$0xf]
    %v1853 = vld [vmem:[%s1850 + $0x8] sm:$0xf]
    %v1854 = vld [vmem:[%s1850 + $0xc] sm:$0xf]
    %v1855 = vld [vmem:[%s1850 + $0x10] sm:$0xf]
    %v1856 = vld [vmem:[%s1850 + $0x14] sm:$0xf]
    %v1857 = vld [vmem:[%s1850 + $0x18] sm:$0xf]
    %v1858 = vld [vmem:[%s1850 + $0x1c] sm:$0xf]
    %v1859 = vld [vmem:[%s1850 + $0x20] sm:$0xf]
    %v1860 = vld [vmem:[%s1850 + $0x24] sm:$0xf]
    %v1861 = vld [vmem:[%s1850 + $0x28] sm:$0xf]
    %v1862 = vld [vmem:[%s1850 + $0x2c] sm:$0xf]
    %v1863 = vld [vmem:[%s1850 + $0x30] sm:$0xf]
    %v1864 = vld [vmem:[%s1850 + $0x34] sm:$0xf]
    %v1865 = vld [vmem:[%s1850 + $0x38] sm:$0xf]
    %v1866 = vld [vmem:[%s1850 + $0x3c] sm:$0xf]
    %v1883 = vunpack.c.l.b16 %v1851
    %v1884 = vunpack.c.l.b16 %v1852
    %v1885 = vunpack.c.l.b16 %v1853
    %v1886 = vunpack.c.l.b16 %v1854
    %v1887 = vunpack.c.l.b16 %v1855
    %v1888 = vunpack.c.l.b16 %v1856
    %v1889 = vunpack.c.l.b16 %v1857
    %v1890 = vunpack.c.l.b16 %v1858
    %v1891 = vunpack.c.l.b16 %v1859
    %v1892 = vunpack.c.l.b16 %v1860
    %v1893 = vunpack.c.l.b16 %v1861
    %v1894 = vunpack.c.l.b16 %v1862
    %v1895 = vunpack.c.l.b16 %v1863
    %v1896 = vunpack.c.l.b16 %v1864
    %v1897 = vunpack.c.l.b16 %v1865
    %v1898 = vunpack.c.l.b16 %v1866
    %v1899 = vpack.c.b16 %v1884, %v1883
    %v1900 = vpack.c.b16 %v1886, %v1885
    %v1901 = vpack.c.b16 %v1888, %v1887
    %v1902 = vpack.c.b16 %v1890, %v1889
    %v1903 = vpack.c.b16 %v1892, %v1891
    %v1904 = vpack.c.b16 %v1894, %v1893
    %v1905 = vpack.c.b16 %v1896, %v1895
    %v1906 = vpack.c.b16 %v1898, %v1897
    %1915 = vmatpush.bf16.msra.mxu0 %v1906
    %1916 = vmatpush.bf16.msra.mxu0 %v1905
    %1917 = vmatpush.bf16.msra.mxu0 %v1904
    %1918 = vmatpush.bf16.msra.mxu0 %v1903
    %1919 = vmatpush.bf16.msra.mxu0 %v1902
    %1920 = vmatpush.bf16.msra.mxu0 %v1901
    %1921 = vmatpush.bf16.msra.mxu0 %v1900
    %1922 = vmatpush.bf16.msra.mxu0 %v1899
    %1923 = vmatmul.bf16.gmra.mxu0 %v1849
    %v1924 = vpop.f32.mrf.mxu0
    %v1925 = vadd.f32 0.0, %v1924
    %v1926 = vpop.f32.mrf.mxu0
    %1927 = vdwg.mxu0
    %v1928 = vadd.f32 %v1828, %v1925
    %s1929 = scalar_lea.vmem %s19, 3
    %v1930 = vld [vmem:[%s1929] sm:$0x1]
    %v1932 = vsel %vm1635, %v1930, 0
    %1934 = vmatpush.bf16.msra.mxu0 0
    %1935 = vmatpush.bf16.msra.mxu0 0
    %1936 = vmatpush.bf16.msra.mxu0 0
    %1937 = vmatpush.bf16.msra.mxu0 0
    %1938 = vmatpush.bf16.msra.mxu0 0
    %1939 = vmatpush.bf16.msra.mxu0 0
    %1940 = vmatpush.bf16.msra.mxu0 0
    %1941 = vmatpush.bf16.msra.mxu0 %v1641
    %1942 = vmatmul.bf16.gmra.mxu0 %v1932
    %v1943 = vpop.f32.mrf.mxu0
    %v1944 = vadd.f32 0.0, %v1943
    %v1945 = vpop.f32.mrf.mxu0
    %1946 = vdwg.mxu0
    %v1947 = vpack.c.bf16 %v1944, %v1944
    %s1948 = scalar_lea.vmem %s20, 192
    %v1949 = vld [vmem:[%s1948] sm:$0xf]
    %v1950 = vld [vmem:[%s1948 + $0x4] sm:$0xf]
    %v1951 = vld [vmem:[%s1948 + $0x8] sm:$0xf]
    %v1952 = vld [vmem:[%s1948 + $0xc] sm:$0xf]
    %v1953 = vld [vmem:[%s1948 + $0x10] sm:$0xf]
    %v1954 = vld [vmem:[%s1948 + $0x14] sm:$0xf]
    %v1955 = vld [vmem:[%s1948 + $0x18] sm:$0xf]
    %v1956 = vld [vmem:[%s1948 + $0x1c] sm:$0xf]
    %v1957 = vld [vmem:[%s1948 + $0x20] sm:$0xf]
    %v1958 = vld [vmem:[%s1948 + $0x24] sm:$0xf]
    %v1959 = vld [vmem:[%s1948 + $0x28] sm:$0xf]
    %v1960 = vld [vmem:[%s1948 + $0x2c] sm:$0xf]
    %v1961 = vld [vmem:[%s1948 + $0x30] sm:$0xf]
    %v1962 = vld [vmem:[%s1948 + $0x34] sm:$0xf]
    %v1963 = vld [vmem:[%s1948 + $0x38] sm:$0xf]
    %v1964 = vld [vmem:[%s1948 + $0x3c] sm:$0xf]
    %v1981 = vunpack.c.l.b16 %v1949
    %v1982 = vunpack.c.l.b16 %v1950
    %v1983 = vunpack.c.l.b16 %v1951
    %v1984 = vunpack.c.l.b16 %v1952
    %v1985 = vunpack.c.l.b16 %v1953
    %v1986 = vunpack.c.l.b16 %v1954
    %v1987 = vunpack.c.l.b16 %v1955
    %v1988 = vunpack.c.l.b16 %v1956
    %v1989 = vunpack.c.l.b16 %v1957
    %v1990 = vunpack.c.l.b16 %v1958
    %v1991 = vunpack.c.l.b16 %v1959
    %v1992 = vunpack.c.l.b16 %v1960
    %v1993 = vunpack.c.l.b16 %v1961
    %v1994 = vunpack.c.l.b16 %v1962
    %v1995 = vunpack.c.l.b16 %v1963
    %v1996 = vunpack.c.l.b16 %v1964
    %v1997 = vpack.c.b16 %v1982, %v1981
    %v1998 = vpack.c.b16 %v1984, %v1983
    %v1999 = vpack.c.b16 %v1986, %v1985
    %v2000 = vpack.c.b16 %v1988, %v1987
    %v2001 = vpack.c.b16 %v1990, %v1989
    %v2002 = vpack.c.b16 %v1992, %v1991
    %v2003 = vpack.c.b16 %v1994, %v1993
    %v2004 = vpack.c.b16 %v1996, %v1995
    %2013 = vmatpush.bf16.msra.mxu0 %v2004
    %2014 = vmatpush.bf16.msra.mxu0 %v2003
    %2015 = vmatpush.bf16.msra.mxu0 %v2002
    %2016 = vmatpush.bf16.msra.mxu0 %v2001
    %2017 = vmatpush.bf16.msra.mxu0 %v2000
    %2018 = vmatpush.bf16.msra.mxu0 %v1999
    %2019 = vmatpush.bf16.msra.mxu0 %v1998
    %2020 = vmatpush.bf16.msra.mxu0 %v1997
    %2021 = vmatmul.bf16.gmra.mxu0 %v1947
    %v2022 = vpop.f32.mrf.mxu0
    %v2023 = vadd.f32 0.0, %v2022
    %v2024 = vpop.f32.mrf.mxu0
    %2025 = vdwg.mxu0
    %v2026 = vadd.f32 %v1928, %v2023
    %v2027 = vld [vmem:[%s21] sm:$0xff]
    %v2028 = vld [vmem:[%s21 + $0x8] sm:$0xff]
    %v2029 = vld [vmem:[%s21 + $0x10] sm:$0xff]
    %v2030 = vld [vmem:[%s21 + $0x18] sm:$0xff]
    %vm2031 = vcmask 254976
    %v2032 = vsel %vm2031, %v2026, 0.0
    %v2033 = vrot.slane %v2032, 4
    %v2034 = vadd.f32 %v2032, %v2033
    %v2035 = vrot.slane %v2034, 2
    %v2036 = vadd.f32 %v2034, %v2035
    %v2037 = vrot.slane %v2036, 1
    %v2038 = vadd.f32 %v2036, %v2037
    %v2040 = vsel %vm95, %v2038, 0
    %2042 = vmatpush.msra.mxu0 0.0
    %2043 = vmatpush.msra.mxu0 0.0
    %2044 = vmatpush.msra.mxu0 0.0
    %2045 = vmatpush.msra.mxu0 0.0
    %2046 = vmatpush.msra.mxu0 0.0
    %2047 = vmatpush.msra.mxu0 0.0
    %2048 = vmatpush.msra.mxu0 0.0
    %2049 = vmatpush.msra.mxu0 0.0
    %2050 = vmatpush.msra.mxu0 0.0
    %2051 = vmatpush.msra.mxu0 0.0
    %2052 = vmatpush.msra.mxu0 0.0
    %2053 = vmatpush.msra.mxu0 0.0
    %2054 = vmatpush.msra.mxu0 %v2030
    %2055 = vmatpush.msra.mxu0 %v2029
    %2056 = vmatpush.msra.mxu0 %v2028
    %2057 = vmatpush.msra.mxu0 %v2027
    %2058 = vmatmul.f32.gmra.mxu0 %v2040
    %v2059 = vpop.f32.mrf.mxu0
    %v2060 = vadd.f32 0.0, %v2059
    %2061 = vdwg.mxu0
    %v2062 = vmul.f32 %v2026, %v2026
    %v2063 = vsel %vm2031, %v2062, 0.0
    %v2064 = vrot.slane %v2063, 4
    %v2065 = vadd.f32 %v2063, %v2064
    %v2066 = vrot.slane %v2065, 2
    %v2067 = vadd.f32 %v2065, %v2066
    %v2068 = vrot.slane %v2067, 1
    %v2069 = vadd.f32 %v2067, %v2068
    %v2071 = vsel %vm95, %v2069, 0
    %2073 = vmatpush.msra.mxu0 0.0
    %2074 = vmatpush.msra.mxu0 0.0
    %2075 = vmatpush.msra.mxu0 0.0
    %2076 = vmatpush.msra.mxu0 0.0
    %2077 = vmatpush.msra.mxu0 0.0
    %2078 = vmatpush.msra.mxu0 0.0
    %2079 = vmatpush.msra.mxu0 0.0
    %2080 = vmatpush.msra.mxu0 0.0
    %2081 = vmatpush.msra.mxu0 0.0
    %2082 = vmatpush.msra.mxu0 0.0
    %2083 = vmatpush.msra.mxu0 0.0
    %2084 = vmatpush.msra.mxu0 0.0
    %2085 = vmatpush.msra.mxu0 %v2030
    %2086 = vmatpush.msra.mxu0 %v2029
    %2087 = vmatpush.msra.mxu0 %v2028
    %2088 = vmatpush.msra.mxu0 %v2027
    %2089 = vmatmul.f32.gmra.mxu0 %v2071
    %v2090 = vpop.f32.mrf.mxu0
    %v2091 = vadd.f32 0.0, %v2090
    %2092 = vdwg.mxu0
    %v2093 = vmul.f32 %v2060, 0.5
    %v2094 = vmul.f32 %v2091, 0.5
    %v2095 = vmul.f32 %v2093, %v2093
    %v2096 = vsub.f32 %v2094, %v2095
    %v2097 = vmax.f32 %v2096, 0.0
    %v2098 = vld [vmem:[%s23] sm:$0x1]
    %v2099 = vadd.f32 %v2097, 1e-05
    %v2100 = vrsqrt.pop %v2099
    %v2101 = vmul.f32 %v2100, %v2099
    %v2102 = vmul.f32 %v2101, %v2100
    %v2103 = vmul.f32 0.5, %v2102
    %v2104 = vsub.f32 1.5, %v2103
    %v2105 = vmul.f32 %v2100, %v2104
    %vm2106 = vweird.f32 %v2099
    %vm2107 = vweird.f32 %v2100
    %vm2108 = vmor %vm2106, %vm2107
    %v2109 = vsel %vm2108, %v2100, %v2105
    %v2110 = vmul.f32 %v2098, %v2109
    %v2111 = vld [vmem:[%s24] sm:$0x1]
    %v2112 = vmul.f32 %v2093, %v2110
    %v2113 = vsub.f32 %v2111, %v2112
    %v2114 = vld [vmem:[%s22] sm:$0xff]
    %v2115 = vld [vmem:[%s22 + $0x8] sm:$0xff]
    %v2116 = vld [vmem:[%s22 + $0x10] sm:$0xff]
    %v2117 = vld [vmem:[%s22 + $0x18] sm:$0xff]
    %v2119 = vsel %vm95, %v2110, 0
    %2121 = vmatpush.msra.mxu0 0.0
    %2122 = vmatpush.msra.mxu0 0.0
    %2123 = vmatpush.msra.mxu0 0.0
    %2124 = vmatpush.msra.mxu0 0.0
    %2125 = vmatpush.msra.mxu0 0.0
    %2126 = vmatpush.msra.mxu0 0.0
    %2127 = vmatpush.msra.mxu0 0.0
    %2128 = vmatpush.msra.mxu0 0.0
    %2129 = vmatpush.msra.mxu0 0.0
    %2130 = vmatpush.msra.mxu0 0.0
    %2131 = vmatpush.msra.mxu0 0.0
    %2132 = vmatpush.msra.mxu0 0.0
    %2133 = vmatpush.msra.mxu0 %v2117
    %2134 = vmatpush.msra.mxu0 %v2116
    %2135 = vmatpush.msra.mxu0 %v2115
    %2136 = vmatpush.msra.mxu0 %v2114
    %2137 = vmatmul.f32.gmra.mxu0 %v2119
    %v2138 = vpop.f32.mrf.mxu0
    %v2139 = vadd.f32 0.0, %v2138
    %2140 = vdwg.mxu0
    %v2141 = vperm.slane %v2139, 0
    %v2142 = vmul.f32 %v2026, %v2141
    %v2144 = vsel %vm95, %v2113, 0
    %2146 = vmatpush.msra.mxu0 0.0
    %2147 = vmatpush.msra.mxu0 0.0
    %2148 = vmatpush.msra.mxu0 0.0
    %2149 = vmatpush.msra.mxu0 0.0
    %2150 = vmatpush.msra.mxu0 0.0
    %2151 = vmatpush.msra.mxu0 0.0
    %2152 = vmatpush.msra.mxu0 0.0
    %2153 = vmatpush.msra.mxu0 0.0
    %2154 = vmatpush.msra.mxu0 0.0
    %2155 = vmatpush.msra.mxu0 0.0
    %2156 = vmatpush.msra.mxu0 0.0
    %2157 = vmatpush.msra.mxu0 0.0
    %2158 = vmatpush.msra.mxu0 %v2117
    %2159 = vmatpush.msra.mxu0 %v2116
    %2160 = vmatpush.msra.mxu0 %v2115
    %2161 = vmatpush.msra.mxu0 %v2114
    %2162 = vmatmul.f32.gmra.mxu0 %v2144
    %v2163 = vpop.f32.mrf.mxu0
    %v2164 = vadd.f32 0.0, %v2163
    %2165 = vdwg.mxu0
    %v2166 = vperm.slane %v2164, 0
    %v2167 = vadd.f32 %v2142, %v2166
    %v2168 = vtanh.pop %v2167
    %2169 = vst.msk [vmem:[#allocation2] sm:$0x3] %vm2031, %v2168
    // Predicated region
    $region102: #{encoder_forward.1} parent=1 // pred_check
      _
    $region103: #{encoder_forward.1} parent=1 // pred_check_branch
      %2171 = sbr.rel (0) target = $region105
    $region104: #{encoder_forward.1} parent=1 // pred_region
      %2173 = vsyncadd [#allocation3], 0
      %s2175 = sshll.u32 [#allocation2], 4
      %s2176 = int_to_ptr.vmem [resolvable:$true] %s2175
      %s2177 = sshll.u32 %s25, 4
      %s2178 = int_to_ptr.hbm [resolvable:$true] %s2177
      %2180 = dma.vmem_to_hbm [thread:$0]  %s2176, 32, %s2178, [#allocation3]
    $region105: #{encoder_forward.1} parent=1 // pred_fallthru
      _
    // Predicated region
    $region106: #{encoder_forward.1} parent=1 // pred_check
      _
    $region107: #{encoder_forward.1} parent=1 // pred_check_branch
      %2182 = sbr.rel (0) target = $region109
    $region108: #{encoder_forward.1} parent=1 // pred_region
      %2184 = dma.done [#allocation3], 32
    $region109: #{encoder_forward.1} parent=1 // pred_fallthru
      _
    %2185 = vsyncpa [#allocation3], 1

</llo_original>
